<compile_context>
chip_gen: v7x
topology: tpu7x:2x2x1
jax: 0.10.0
libtpu: 0.0.40
codegen_flags: <defaults>
</compile_context>

<pallas_src>
import functools

import jax
import jax.numpy as jnp
from jax.experimental import pallas as pl
from jax.experimental.pallas import tpu as pltpu


_TARGET_TILE_BYTES = 2 << 20  # ~2 MiB per (single) input buffer; mem-bound plateau


# ---------------------------------------------------------------------------
# Kernels
# ---------------------------------------------------------------------------
def _layernorm_kernel(x_ref, a_ref, b_ref, o_ref, *, eps):
    # x_ref: (T, F), a_ref/b_ref: (1, F), o_ref: (T, F). One logical row per kernel row.
    x = x_ref[...].astype(jnp.float32)
    f = x.shape[-1]
    # One-pass statistics: read the tile once for both sums.
    s1 = jnp.sum(x, axis=-1, keepdims=True)                    # (T, 1)
    s2 = jnp.sum(x * x, axis=-1, keepdims=True)                # (T, 1)
    mean = s1 * jnp.float32(1.0 / f)
    # Unbiased (ddof=1) variance, guarded against tiny negative cancellation.
    var = (s2 - s1 * mean) * jnp.float32(1.0 / (f - 1))
    var = jnp.maximum(var, jnp.float32(0.0))
    denom = jnp.sqrt(var) + jnp.float32(eps)                   # eps OUTSIDE sqrt
    inv = jnp.float32(1.0) / denom                             # exact, only T values
    y = a_ref[...].astype(jnp.float32) * ((x - mean) * inv) \
        + b_ref[...].astype(jnp.float32)
    o_ref[...] = y.astype(o_ref.dtype)


def _layernorm_packed_kernel(x_ref, a_ref, b_ref, seg_ref, segt_ref, o_ref, *,
                             eps, features):
    # Lane-dense small-F path: x_ref is (T, k*F) with k = 128 // F logical rows
    # packed along the 128-lane axis. Per-row statistics are segmented reductions,
    # computed with tiny one-hot matmuls (MXU), so every load/store is unmasked.
    x = x_ref[...].astype(jnp.float32)                         # (T, k*F)
    seg = seg_ref[...]                                         # (k*F, k) one-hot, f32
    segt = segt_ref[...]                                       # (k, k*F)
    hp = jax.lax.Precision.HIGHEST                             # keep stats in full f32
    s1 = jnp.dot(x, seg, precision=hp, preferred_element_type=jnp.float32)      # (T, k)
    s2 = jnp.dot(x * x, seg, precision=hp, preferred_element_type=jnp.float32)  # (T, k)
    mean = s1 * jnp.float32(1.0 / features)
    var = (s2 - s1 * mean) * jnp.float32(1.0 / (features - 1))
    var = jnp.maximum(var, jnp.float32(0.0))
    inv = jnp.float32(1.0) / (jnp.sqrt(var) + jnp.float32(eps))                 # (T, k)
    # Broadcast the per-segment stats back to the full lane width.
    mean_full = jnp.dot(mean, segt, precision=hp, preferred_element_type=jnp.float32)
    inv_full = jnp.dot(inv, segt, precision=hp, preferred_element_type=jnp.float32)
    y = a_ref[...].astype(jnp.float32) * ((x - mean_full) * inv_full) \
        + b_ref[...].astype(jnp.float32)
    o_ref[...] = y.astype(o_ref.dtype)


# ---------------------------------------------------------------------------
# Sizing helpers
# ---------------------------------------------------------------------------
def _sublane_multiple(dtype) -> int:
    # f32 -> 8 sublanes, bf16/f16 -> 16, int8/fp8 -> 32.
    return {4: 8, 2: 16, 1: 32}.get(jnp.dtype(dtype).itemsize, 8)


def _pick_tile_rows(kernel_rows: int, kernel_feats: int, dtype, forced=None) -> int:
    """Sublane-aligned row tile: ~2 MiB per input buffer, grid kept >= ~4 steps."""
    sub = _sublane_multiple(dtype)
    if kernel_rows <= sub:
        return int(kernel_rows)                      # full-extent block (allowed)
    if forced is not None:
        tile = max(sub, (int(forced) // sub) * sub)
    else:
        row_bytes = max(kernel_feats * jnp.dtype(dtype).itemsize, 1)
        tile = max(sub, (_TARGET_TILE_BYTES // row_bytes // sub) * sub)
        # Keep >= ~4 grid steps when there is enough work: better pipelining and
        # an even split of the "parallel" axis across v7x's 2 TensorCores.
        if kernel_rows > 4 * sub:
            balanced = ((pl.cdiv(kernel_rows, 4) + sub - 1) // sub) * sub
            tile = min(tile, balanced)
    # Never exceed the sublane-aligned row extent (partial tail is masked).
    return int(min(tile, max(sub, (kernel_rows // sub) * sub)))


def _vmem_limit_bytes(tile_rows: int, kernel_feats: int, dtype) -> int:
    """Scoped-VMEM request sized from the actual working set (+25% margin)."""
    itemsize = jnp.dtype(dtype).itemsize
    io_tile = tile_rows * kernel_feats * itemsize
    n_tmp = 3 if itemsize >= 4 else 4                # f32 upcast temporaries in-kernel
    f32_tmp = n_tmp * tile_rows * kernel_feats * 4
    resident = 4 * kernel_feats * 4                  # gamma/beta (+ tiny seg matrices)
    working = 2 * 2 * io_tile + f32_tmp + resident   # double-buffered in + out tiles
    limit = int(working * 1.25) + (2 << 20)          # 25% margin + slack
    # Floor above v5e's 16 MiB default scoped limit; cap well under v7x's 64 MiB VMEM.
    return max(min(limit, 40 << 20), 16 << 20)


# ---------------------------------------------------------------------------
# Wrapper
# ---------------------------------------------------------------------------
def layer_norm(x, a_2, b_2, eps=1e-6, *, tile_rows=None):
    """LayerNorm over the last axis: a_2 * (x - mean) / (std + eps) + b_2."""
    orig_shape = x.shape
    features = int(orig_shape[-1])
    assert features > 1, "unbiased std (ddof=1) requires features > 1"

    n_rows = 1
    for d in orig_shape[:-1]:
        n_rows *= int(d)
    n_rows = max(n_rows, 1)

    # Lane-dense packing for small F (F < 128 and F | 128): k rows per kernel row.
    # TODO(synk): for F < 128 that does NOT divide 128 (or rows % k != 0), a padded
    # repack would be needed for lane density; we fall back to the masked-lane path.
    pack = (features < 128) and (128 % features == 0)
    k = 128 // features if pack else 1
    if pack and (n_rows % k != 0):
        pack = False
        k = 1

    a2 = a_2.reshape(1, features)
    b2 = b_2.reshape(1, features)

    if pack:
        kernel_feats = k * features
        x2 = x.reshape(n_rows // k, kernel_feats)            # free row-major reshape
        a2k = jnp.tile(a2, (1, k))
        b2k = jnp.tile(b2, (1, k))
        seg = (jnp.arange(kernel_feats)[:, None] // features
               == jnp.arange(k)[None, :]).astype(jnp.float32)   # (k*F, k)
        segt = seg.T                                             # (k, k*F)
        kernel = functools.partial(_layernorm_packed_kernel, eps=float(eps),
                                   features=features)
        in_arrays = (x2, a2k, b2k, seg, segt)
    else:
        kernel_feats = features
        x2 = x.reshape(n_rows, features)
        kernel = functools.partial(_layernorm_kernel, eps=float(eps))
        in_arrays = (x2, a2, b2)

    kernel_rows = x2.shape[0]
    tr = _pick_tile_rows(kernel_rows, kernel_feats, x.dtype, forced=tile_rows)
    grid = (pl.cdiv(kernel_rows, tr),)
    vmem_limit = _vmem_limit_bytes(tr, kernel_feats, x.dtype)

    x_spec = pl.BlockSpec((tr, kernel_feats), lambda i: (i, 0))
    # Constant index_map: params / segment matrices stay VMEM-resident.
    p_spec = pl.BlockSpec((1, kernel_feats), lambda i: (0, 0))
    if pack:
        in_specs = [x_spec, p_spec, p_spec,
                    pl.BlockSpec((kernel_feats, k), lambda i: (0, 0)),
                    pl.BlockSpec((k, kernel_feats), lambda i: (0, 0))]
    else:
        in_specs = [x_spec, p_spec, p_spec]

    out = pl.pallas_call(
        kernel,
        out_shape=jax.ShapeDtypeStruct((kernel_rows, kernel_feats), x.dtype),
        grid_spec=pltpu.PrefetchScalarGridSpec(
            num_scalar_prefetch=0,
            grid=grid,
            in_specs=in_specs,
            out_specs=pl.BlockSpec((tr, kernel_feats), lambda i: (i, 0)),
        ),
        compiler_params=pltpu.CompilerParams(
            dimension_semantics=("parallel",),
            vmem_limit_bytes=int(vmem_limit),
        ),
    )(*in_arrays)

    return out.reshape(orig_shape)


# ---------------------------------------------------------------------------
# Reference + tests
# ---------------------------------------------------------------------------
def _reference(x, a_2, b_2, eps):
    f = x.shape[-1]
    mean = jnp.mean(x, axis=-1, keepdims=True)
    std = jnp.sqrt(jnp.sum((x - mean) ** 2, axis=-1, keepdims=True) / (f - 1))
    return a_2 * (x - mean) / (std + eps) + b_2


if __name__ == "__main__":
    key = jax.random.PRNGKey(0)
    k1, k2, k3, k4, k5, k6, k7 = jax.random.split(key, 7)
    ATOL = RTOL = 2e-5

    # --- Test 1: module-style shapes (hidden=32 < 128 -> lane-dense packed path) ---
    batch, seq, hidden = 2, 8, 32
    x = jax.random.normal(k1, (batch, seq, hidden), dtype=jnp.float32)
    a_2 = jnp.ones((hidden,), dtype=jnp.float32)
    b_2 = jnp.zeros((hidden,), dtype=jnp.float32)
    out = layer_norm(x, a_2, b_2, eps=1e-6)
    jax.block_until_ready(out)
    ref = _reference(x, a_2, b_2, 1e-6)
    assert jnp.allclose(out, ref, atol=ATOL, rtol=RTOL), "mismatch vs reference (test 1)"

    # --- Test 2: F=128, non-divisible row count, forced small tile (masked tail) ---
    xb, xs, xh = 3, 7, 128
    x2 = jax.random.normal(k2, (xb, xs, xh), dtype=jnp.float32)
    g2 = jax.random.normal(k3, (xh,), dtype=jnp.float32)
    be2 = jax.random.normal(k4, (xh,), dtype=jnp.float32)
    out2 = layer_norm(x2, g2, be2, eps=1e-6, tile_rows=8)  # grid=3, partial last block
    jax.block_until_ready(out2)
    ref2 = _reference(x2, g2, be2, 1e-6)
    assert jnp.allclose(out2, ref2, atol=ATOL, rtol=RTOL), "mismatch vs reference (test 2)"

    # --- Test 3: small F that does NOT divide 128 -> unpacked masked-lane fallback ---
    x3 = jax.random.normal(k5, (5, 3, 48), dtype=jnp.float32)
    g3 = jax.random.normal(k6, (48,), dtype=jnp.float32)
    be3 = jax.random.normal(k7, (48,), dtype=jnp.float32)
    out3 = layer_norm(x3, g3, be3, eps=1e-6)
    jax.block_until_ready(out3)
    ref3 = _reference(x3, g3, be3, 1e-6)
    assert jnp.allclose(out3, ref3, atol=ATOL, rtol=RTOL), "mismatch vs reference (test 3)"

    # --- Test 4: packed path (F=64 -> k=2) with a partial last block ---
    x4 = jax.random.normal(k2, (2, 9, 64), dtype=jnp.float32)
    g4 = jnp.ones((64,), dtype=jnp.float32) * 1.5
    be4 = jnp.ones((64,), dtype=jnp.float32) * 0.25
    out4 = layer_norm(x4, g4, be4, eps=1e-6)
    jax.block_until_ready(out4)
    ref4 = _reference(x4, g4, be4, 1e-6)
    assert jnp.allclose(out4, ref4, atol=ATOL, rtol=RTOL), "mismatch vs reference (test 4)"

    print("KERNEL_OK")
</pallas_src>

<mosaic_0001>
module attributes {stable_mosaic.version = 11 : i64} {
  func.func @_layernorm_packed_kernel(%arg0: i32, %arg1: memref<4x128xf32, #tpu.memory_space<vmem>>, %arg2: memref<1x128xf32, #tpu.memory_space<vmem>>, %arg3: memref<1x128xf32, #tpu.memory_space<vmem>>, %arg4: memref<128x4xf32, #tpu.memory_space<vmem>>, %arg5: memref<4x128xf32, #tpu.memory_space<vmem>>, %arg6: memref<4x128xf32, #tpu.memory_space<vmem>>) attributes {dimension_semantics = [#tpu.dimension_semantics<parallel>], iteration_bounds = array<i64: 1>, scalar_prefetch = 0 : i64, scratch_operands = 0 : i64, tpu.core_type = #tpu.core_type<tc>, window_params = [{transform_indices = @transform_0, window_bounds = array<i64: 4, 128>}, {pipeline_mode = #tpu.pipeline_mode<synchronous>, transform_indices = @transform_1, window_bounds = array<i64: 1, 128>}, {pipeline_mode = #tpu.pipeline_mode<synchronous>, transform_indices = @transform_2, window_bounds = array<i64: 1, 128>}, {pipeline_mode = #tpu.pipeline_mode<synchronous>, transform_indices = @transform_3, window_bounds = array<i64: 128, 4>}, {pipeline_mode = #tpu.pipeline_mode<synchronous>, transform_indices = @transform_4, window_bounds = array<i64: 4, 128>}, {transform_indices = @transform_5, window_bounds = array<i64: 4, 128>}]} {
    %c0 = arith.constant 0 : index
    %c0_0 = arith.constant 0 : index
    %0 = vector.load %arg1[%c0, %c0_0] : memref<4x128xf32, #tpu.memory_space<vmem>>, vector<4x128xf32>
    %c0_1 = arith.constant 0 : index
    %c0_2 = arith.constant 0 : index
    %1 = vector.load %arg4[%c0_1, %c0_2] : memref<128x4xf32, #tpu.memory_space<vmem>>, vector<128x4xf32>
    %c0_3 = arith.constant 0 : index
    %c0_4 = arith.constant 0 : index
    %2 = vector.load %arg5[%c0_3, %c0_4] : memref<4x128xf32, #tpu.memory_space<vmem>>, vector<4x128xf32>
    %cst = arith.constant dense<0.000000e+00> : vector<4x4xf32>
    %3 = tpu.matmul %0, %1, %cst {dimension_numbers = #tpu.dot_dimension_numbers<[1], [0], [0], [1], [0, 0, 1, 1], [], []>, precision = #tpu.contract_precision<fp32>} : vector<4x128xf32>, vector<128x4xf32>, vector<4x4xf32> -> vector<4x4xf32>
    %4 = arith.mulf %0, %0 : vector<4x128xf32>
    %cst_5 = arith.constant dense<0.000000e+00> : vector<4x4xf32>
    %5 = tpu.matmul %4, %1, %cst_5 {dimension_numbers = #tpu.dot_dimension_numbers<[1], [0], [0], [1], [0, 0, 1, 1], [], []>, precision = #tpu.contract_precision<fp32>} : vector<4x128xf32>, vector<128x4xf32>, vector<4x4xf32> -> vector<4x4xf32>
    %cst_6 = arith.constant 3.125000e-02 : f32
    %6 = vector.broadcast %cst_6 : f32 to vector<4x4xf32>
    %7 = arith.mulf %3, %6 : vector<4x4xf32>
    %8 = arith.mulf %3, %7 : vector<4x4xf32>
    %9 = arith.subf %5, %8 : vector<4x4xf32>
    %cst_7 = arith.constant 0.0322580636 : f32
    %10 = vector.broadcast %cst_7 : f32 to vector<4x4xf32>
    %11 = arith.mulf %9, %10 : vector<4x4xf32>
    %cst_8 = arith.constant 0.000000e+00 : f32
    %12 = vector.broadcast %cst_8 : f32 to vector<4x4xf32>
    %13 = arith.maximumf %11, %12 : vector<4x4xf32>
    %14 = math.sqrt %13 : vector<4x4xf32>
    %cst_9 = arith.constant 9.99999997E-7 : f32
    %15 = vector.broadcast %cst_9 : f32 to vector<4x4xf32>
    %16 = arith.addf %14, %15 : vector<4x4xf32>
    %cst_10 = arith.constant 1.000000e+00 : f32
    %17 = vector.broadcast %cst_10 : f32 to vector<4x4xf32>
    %18 = arith.divf %17, %16 : vector<4x4xf32>
    %cst_11 = arith.constant dense<0.000000e+00> : vector<4x128xf32>
    %19 = tpu.matmul %7, %2, %cst_11 {dimension_numbers = #tpu.dot_dimension_numbers<[1], [0], [0], [1], [0, 0, 1, 1], [], []>, precision = #tpu.contract_precision<fp32>} : vector<4x4xf32>, vector<4x128xf32>, vector<4x128xf32> -> vector<4x128xf32>
    %cst_12 = arith.constant dense<0.000000e+00> : vector<4x128xf32>
    %20 = tpu.matmul %18, %2, %cst_12 {dimension_numbers = #tpu.dot_dimension_numbers<[1], [0], [0], [1], [0, 0, 1, 1], [], []>, precision = #tpu.contract_precision<fp32>} : vector<4x4xf32>, vector<4x128xf32>, vector<4x128xf32> -> vector<4x128xf32>
    %c0_13 = arith.constant 0 : index
    %c0_14 = arith.constant 0 : index
    %21 = vector.load %arg2[%c0_13, %c0_14] : memref<1x128xf32, #tpu.memory_space<vmem>>, vector<1x128xf32>
    %22 = arith.subf %0, %19 : vector<4x128xf32>
    %23 = arith.mulf %22, %20 : vector<4x128xf32>
    %24 = vector.broadcast %21 : vector<1x128xf32> to vector<4x128xf32>
    %25 = arith.mulf %24, %23 : vector<4x128xf32>
    %c0_15 = arith.constant 0 : index
    %c0_16 = arith.constant 0 : index
    %26 = vector.load %arg3[%c0_15, %c0_16] : memref<1x128xf32, #tpu.memory_space<vmem>>, vector<1x128xf32>
    %27 = vector.broadcast %26 : vector<1x128xf32> to vector<4x128xf32>
    %28 = arith.addf %25, %27 : vector<4x128xf32>
    %c0_17 = arith.constant 0 : index
    %c0_18 = arith.constant 0 : index
    %29 = vector.load %arg6[%c0_17, %c0_18] : memref<4x128xf32, #tpu.memory_space<vmem>>, vector<4x128xf32>
    tpu.vector_store %arg6[%c0_17, %c0_18], %28 {strides = array<i32>} : memref<4x128xf32, #tpu.memory_space<vmem>>, vector<4x128xf32>,
    return
  }
  func.func @transform_0(%arg0: i32) -> (i32, i32) {
    %c0_i32 = arith.constant 0 : i32
    %c0_i32_0 = arith.constant 0 : i32
    return %arg0, %c0_i32 : i32, i32
  }
  func.func @transform_1(%arg0: i32) -> (i32, i32) {
    %c0_i32 = arith.constant 0 : i32
    %c0_i32_0 = arith.constant 0 : i32
    %c0_i32_1 = arith.constant 0 : i32
    return %c0_i32, %c0_i32_0 : i32, i32
  }
  func.func @transform_2(%arg0: i32) -> (i32, i32) {
    %c0_i32 = arith.constant 0 : i32
    %c0_i32_0 = arith.constant 0 : i32
    %c0_i32_1 = arith.constant 0 : i32
    return %c0_i32, %c0_i32_0 : i32, i32
  }
  func.func @transform_3(%arg0: i32) -> (i32, i32) {
    %c0_i32 = arith.constant 0 : i32
    %c0_i32_0 = arith.constant 0 : i32
    %c0_i32_1 = arith.constant 0 : i32
    return %c0_i32, %c0_i32_0 : i32, i32
  }
  func.func @transform_4(%arg0: i32) -> (i32, i32) {
    %c0_i32 = arith.constant 0 : i32
    %c0_i32_0 = arith.constant 0 : i32
    %c0_i32_1 = arith.constant 0 : i32
    return %c0_i32, %c0_i32_0 : i32, i32
  }
  func.func @transform_5(%arg0: i32) -> (i32, i32) {
    %c0_i32 = arith.constant 0 : i32
    %c0_i32_0 = arith.constant 0 : i32
    return %arg0, %c0_i32 : i32, i32
  }
}

</mosaic_0001>

<llo_original>
// kernel: tpu_custom_call.1
$region0: #{tpu_custom_call.1}
  #allocation0 [shape = 'u32[]', space=smem, size = 0x4, offset = 0x4, fixed_abs, tag = 'smem constant byte address 0x4 - core index']
  #allocation1 [shape = 'u32[144,128]{1,0:T(1,128)}', space=vmem, size = 0x12000, scoped, tag = 'internal scratch']
  %s0 = inlined_call_operand.vmem [shape: f32[4,128], index: 0, kind: input, shape index: {}]
  %s1 = inlined_call_operand.vmem [shape: f32[1,128], index: 1, kind: input, shape index: {}]
  %s2 = inlined_call_operand.vmem [shape: f32[1,128], index: 2, kind: input, shape index: {}]
  %s3 = inlined_call_operand.vmem [shape: f32[128,4], index: 3, kind: input, shape index: {}]
  %s4 = inlined_call_operand.vmem [shape: f32[4,128], index: 4, kind: input, shape index: {}]
  %s5 = inlined_call_operand.hbm [shape: f32[4,128], index: 5, kind: output, shape index: {}]
  %s6 = sld [smem:[#allocation0]]
  $region30: #{tpu_custom_call.1} parent=0
    _
  %s8 = ssub.s32 1, %s6
  %s9 = scalar_select 0, %s8, %s6
  $region1: #{tpu_custom_call.1} parent=0
    #allocation2 [shape = 'u8[2048]{0}', space=vmem, size = 0x800, scoped, tag = 'output window, operand 0, single buffered']
    #allocation3 [shape = 's32[1]{0}', space=sflag, size = 0x4, scoped, tag = 'scoped memory for tpu_custom_call.1']
    %10 = vsyncpa [#allocation3], 0
    // Predicated region
    $region2: #{tpu_custom_call.1} parent=1 // pred_check
      _
    $region3: #{tpu_custom_call.1} parent=1 // pred_check_branch
      %12 = sbr.rel (0) target = $region5
    $region4: #{tpu_custom_call.1} parent=1 // pred_region
      _
    $region5: #{tpu_custom_call.1} parent=1 // pred_fallthru
      _
    // Predicated region
    $region6: #{tpu_custom_call.1} parent=1 // pred_check
      _
    $region7: #{tpu_custom_call.1} parent=1 // pred_check_branch
      %14 = sbr.rel (0) target = $region9
    $region8: #{tpu_custom_call.1} parent=1 // pred_region
      _
    $region9: #{tpu_custom_call.1} parent=1 // pred_fallthru
      _
    // Predicated region
    $region10: #{tpu_custom_call.1} parent=1 // pred_check
      _
    $region11: #{tpu_custom_call.1} parent=1 // pred_check_branch
      %16 = sbr.rel (0) target = $region13
    $region12: #{tpu_custom_call.1} parent=1 // pred_region
      _
    $region13: #{tpu_custom_call.1} parent=1 // pred_fallthru
      _
    // Predicated region
    $region14: #{tpu_custom_call.1} parent=1 // pred_check
      _
    $region15: #{tpu_custom_call.1} parent=1 // pred_check_branch
      %18 = sbr.rel (0) target = $region17
    $region16: #{tpu_custom_call.1} parent=1 // pred_region
      _
    $region17: #{tpu_custom_call.1} parent=1 // pred_fallthru
      _
    // Predicated region
    $region18: #{tpu_custom_call.1} parent=1 // pred_check
      _
    $region19: #{tpu_custom_call.1} parent=1 // pred_check_branch
      %20 = sbr.rel (0) target = $region21
    $region20: #{tpu_custom_call.1} parent=1 // pred_region
      _
    $region21: #{tpu_custom_call.1} parent=1 // pred_fallthru
      _
    %v21 = vld [vmem:[%s0] sm:$0xf]
    %v22 = vld [vmem:[%s3] sm:$0xff]
    %v23 = vld [vmem:[%s3 + $0x8] sm:$0xff]
    %v24 = vld [vmem:[%s3 + $0x10] sm:$0xff]
    %v25 = vld [vmem:[%s3 + $0x18] sm:$0xff]
    %v26 = vld [vmem:[%s3 + $0x20] sm:$0xff]
    %v27 = vld [vmem:[%s3 + $0x28] sm:$0xff]
    %v28 = vld [vmem:[%s3 + $0x30] sm:$0xff]
    %v29 = vld [vmem:[%s3 + $0x38] sm:$0xff]
    %v30 = vld [vmem:[%s3 + $0x40] sm:$0xff]
    %v31 = vld [vmem:[%s3 + $0x48] sm:$0xff]
    %v32 = vld [vmem:[%s3 + $0x50] sm:$0xff]
    %v33 = vld [vmem:[%s3 + $0x58] sm:$0xff]
    %v34 = vld [vmem:[%s3 + $0x60] sm:$0xff]
    %v35 = vld [vmem:[%s3 + $0x68] sm:$0xff]
    %v36 = vld [vmem:[%s3 + $0x70] sm:$0xff]
    %v37 = vld [vmem:[%s3 + $0x78] sm:$0xff]
    %v38 = vld [vmem:[%s4] sm:$0xf]
    %39 = vmatprep.subr.mxu0 0.0
    %v40 = vand.u32 %v22, 4294901760
    %41 = vmatpush1.msra.mxu0 %v40
    %42 = vmatprep.subr.mxu0 0.0
    %v43 = vand.u32 %v23, 4294901760
    %44 = vmatpush1.msra.mxu0 %v43
    %45 = vmatprep.subr.mxu0 0.0
    %v46 = vand.u32 %v24, 4294901760
    %47 = vmatpush1.msra.mxu0 %v46
    %48 = vmatprep.subr.mxu0 0.0
    %v49 = vand.u32 %v25, 4294901760
    %50 = vmatpush1.msra.mxu0 %v49
    %51 = vmatprep.subr.mxu0 0.0
    %v52 = vand.u32 %v26, 4294901760
    %53 = vmatpush1.msra.mxu0 %v52
    %54 = vmatprep.subr.mxu0 0.0
    %v55 = vand.u32 %v27, 4294901760
    %56 = vmatpush1.msra.mxu0 %v55
    %57 = vmatprep.subr.mxu0 0.0
    %v58 = vand.u32 %v28, 4294901760
    %59 = vmatpush1.msra.mxu0 %v58
    %60 = vmatprep.subr.mxu0 0.0
    %v61 = vand.u32 %v29, 4294901760
    %62 = vmatpush1.msra.mxu0 %v61
    %63 = vmatprep.subr.mxu0 0.0
    %v64 = vand.u32 %v30, 4294901760
    %65 = vmatpush1.msra.mxu0 %v64
    %66 = vmatprep.subr.mxu0 0.0
    %v67 = vand.u32 %v31, 4294901760
    %68 = vmatpush1.msra.mxu0 %v67
    %69 = vmatprep.subr.mxu0 0.0
    %v70 = vand.u32 %v32, 4294901760
    %71 = vmatpush1.msra.mxu0 %v70
    %72 = vmatprep.subr.mxu0 0.0
    %v73 = vand.u32 %v33, 4294901760
    %74 = vmatpush1.msra.mxu0 %v73
    %75 = vmatprep.subr.mxu0 0.0
    %v76 = vand.u32 %v34, 4294901760
    %77 = vmatpush1.msra.mxu0 %v76
    %78 = vmatprep.subr.mxu0 0.0
    %v79 = vand.u32 %v35, 4294901760
    %80 = vmatpush1.msra.mxu0 %v79
    %81 = vmatprep.subr.mxu0 0.0
    %v82 = vand.u32 %v36, 4294901760
    %83 = vmatpush1.msra.mxu0 %v82
    %84 = vmatprep.subr.mxu0 0.0
    %v85 = vand.u32 %v37, 4294901760
    %86 = vmatpush1.msra.mxu0 %v85
    %87 = vmatprep.subr.mxu0 0.0
    %88 = vmatpush1.msra.mxu0 0.0
    %89 = vmatprep.subr.mxu0 0.0
    %90 = vmatpush1.msra.mxu0 0.0
    %91 = vmatprep.subr.mxu0 0.0
    %92 = vmatpush1.msra.mxu0 0.0
    %93 = vmatprep.subr.mxu0 0.0
    %94 = vmatpush1.msra.mxu0 0.0
    %95 = vmatprep.subr.mxu0 0.0
    %96 = vmatpush1.msra.mxu0 0.0
    %97 = vmatprep.subr.mxu0 0.0
    %98 = vmatpush1.msra.mxu0 0.0
    %99 = vmatprep.subr.mxu0 0.0
    %100 = vmatpush1.msra.mxu0 0.0
    %101 = vmatprep.subr.mxu0 0.0
    %102 = vmatpush1.msra.mxu0 0.0
    %103 = vmatprep.subr.mxu0 0.0
    %104 = vmatpush1.msra.mxu0 0.0
    %105 = vmatprep.subr.mxu0 0.0
    %106 = vmatpush1.msra.mxu0 0.0
    %107 = vmatprep.subr.mxu0 0.0
    %108 = vmatpush1.msra.mxu0 0.0
    %109 = vmatprep.subr.mxu0 0.0
    %110 = vmatpush1.msra.mxu0 0.0
    %111 = vmatprep.subr.mxu0 0.0
    %112 = vmatpush1.msra.mxu0 0.0
    %113 = vmatprep.subr.mxu0 0.0
    %114 = vmatpush1.msra.mxu0 0.0
    %115 = vmatprep.subr.mxu0 0.0
    %116 = vmatpush1.msra.mxu0 0.0
    %117 = vmatprep.subr.mxu0 0.0
    %118 = vmatpush1.msra.mxu0 0.0
    %119 = vmatprep.mubr.f32.mxu0 0.0
    %v120 = vand.u32 %v21, 4294901760
    %v121 = vsub.f32 %v21, %v120
    %v122 = vand.u32 %v121, 4294901760
    %v123 = vsub.f32 %v121, %v122
    %v124 = vand.u32 %v123, 4294901760
    %125 = vmatmul.mubr.f32.gmra.mrb[0].mxu0 %v124
    %v126 = vpop.f32.mrb[0].mxu0
    %v127 = vadd.f32 0.0, %v126
    %v128 = vpop.f32.mrb[0].mxu0
    %129 = vdwg.mxu0
    %130 = vmatprep.subr.mxu0 0.0
    %v131 = vand.u32 %v22, 4294901760
    %v132 = vsub.f32 %v22, %v131
    %v133 = vand.u32 %v132, 4294901760
    %v134 = vsub.f32 %v132, %v133
    %v135 = vand.u32 %v134, 4294901760
    %136 = vmatpush1.msra.mxu0 %v135
    %137 = vmatprep.subr.mxu0 0.0
    %v138 = vand.u32 %v23, 4294901760
    %v139 = vsub.f32 %v23, %v138
    %v140 = vand.u32 %v139, 4294901760
    %v141 = vsub.f32 %v139, %v140
    %v142 = vand.u32 %v141, 4294901760
    %143 = vmatpush1.msra.mxu0 %v142
    %144 = vmatprep.subr.mxu0 0.0
    %v145 = vand.u32 %v24, 4294901760
    %v146 = vsub.f32 %v24, %v145
    %v147 = vand.u32 %v146, 4294901760
    %v148 = vsub.f32 %v146, %v147
    %v149 = vand.u32 %v148, 4294901760
    %150 = vmatpush1.msra.mxu0 %v149
    %151 = vmatprep.subr.mxu0 0.0
    %v152 = vand.u32 %v25, 4294901760
    %v153 = vsub.f32 %v25, %v152
    %v154 = vand.u32 %v153, 4294901760
    %v155 = vsub.f32 %v153, %v154
    %v156 = vand.u32 %v155, 4294901760
    %157 = vmatpush1.msra.mxu0 %v156
    %158 = vmatprep.subr.mxu0 0.0
    %v159 = vand.u32 %v26, 4294901760
    %v160 = vsub.f32 %v26, %v159
    %v161 = vand.u32 %v160, 4294901760
    %v162 = vsub.f32 %v160, %v161
    %v163 = vand.u32 %v162, 4294901760
    %164 = vmatpush1.msra.mxu0 %v163
    %165 = vmatprep.subr.mxu0 0.0
    %v166 = vand.u32 %v27, 4294901760
    %v167 = vsub.f32 %v27, %v166
    %v168 = vand.u32 %v167, 4294901760
    %v169 = vsub.f32 %v167, %v168
    %v170 = vand.u32 %v169, 4294901760
    %171 = vmatpush1.msra.mxu0 %v170
    %172 = vmatprep.subr.mxu0 0.0
    %v173 = vand.u32 %v28, 4294901760
    %v174 = vsub.f32 %v28, %v173
    %v175 = vand.u32 %v174, 4294901760
    %v176 = vsub.f32 %v174, %v175
    %v177 = vand.u32 %v176, 4294901760
    %178 = vmatpush1.msra.mxu0 %v177
    %179 = vmatprep.subr.mxu0 0.0
    %v180 = vand.u32 %v29, 4294901760
    %v181 = vsub.f32 %v29, %v180
    %v182 = vand.u32 %v181, 4294901760
    %v183 = vsub.f32 %v181, %v182
    %v184 = vand.u32 %v183, 4294901760
    %185 = vmatpush1.msra.mxu0 %v184
    %186 = vmatprep.subr.mxu0 0.0
    %v187 = vand.u32 %v30, 4294901760
    %v188 = vsub.f32 %v30, %v187
    %v189 = vand.u32 %v188, 4294901760
    %v190 = vsub.f32 %v188, %v189
    %v191 = vand.u32 %v190, 4294901760
    %192 = vmatpush1.msra.mxu0 %v191
    %193 = vmatprep.subr.mxu0 0.0
    %v194 = vand.u32 %v31, 4294901760
    %v195 = vsub.f32 %v31, %v194
    %v196 = vand.u32 %v195, 4294901760
    %v197 = vsub.f32 %v195, %v196
    %v198 = vand.u32 %v197, 4294901760
    %199 = vmatpush1.msra.mxu0 %v198
    %200 = vmatprep.subr.mxu0 0.0
    %v201 = vand.u32 %v32, 4294901760
    %v202 = vsub.f32 %v32, %v201
    %v203 = vand.u32 %v202, 4294901760
    %v204 = vsub.f32 %v202, %v203
    %v205 = vand.u32 %v204, 4294901760
    %206 = vmatpush1.msra.mxu0 %v205
    %207 = vmatprep.subr.mxu0 0.0
    %v208 = vand.u32 %v33, 4294901760
    %v209 = vsub.f32 %v33, %v208
    %v210 = vand.u32 %v209, 4294901760
    %v211 = vsub.f32 %v209, %v210
    %v212 = vand.u32 %v211, 4294901760
    %213 = vmatpush1.msra.mxu0 %v212
    %214 = vmatprep.subr.mxu0 0.0
    %v215 = vand.u32 %v34, 4294901760
    %v216 = vsub.f32 %v34, %v215
    %v217 = vand.u32 %v216, 4294901760
    %v218 = vsub.f32 %v216, %v217
    %v219 = vand.u32 %v218, 4294901760
    %220 = vmatpush1.msra.mxu0 %v219
    %221 = vmatprep.subr.mxu0 0.0
    %v222 = vand.u32 %v35, 4294901760
    %v223 = vsub.f32 %v35, %v222
    %v224 = vand.u32 %v223, 4294901760
    %v225 = vsub.f32 %v223, %v224
    %v226 = vand.u32 %v225, 4294901760
    %227 = vmatpush1.msra.mxu0 %v226
    %228 = vmatprep.subr.mxu0 0.0
    %v229 = vand.u32 %v36, 4294901760
    %v230 = vsub.f32 %v36, %v229
    %v231 = vand.u32 %v230, 4294901760
    %v232 = vsub.f32 %v230, %v231
    %v233 = vand.u32 %v232, 4294901760
    %234 = vmatpush1.msra.mxu0 %v233
    %235 = vmatprep.subr.mxu0 0.0
    %v236 = vand.u32 %v37, 4294901760
    %v237 = vsub.f32 %v37, %v236
    %v238 = vand.u32 %v237, 4294901760
    %v239 = vsub.f32 %v237, %v238
    %v240 = vand.u32 %v239, 4294901760
    %241 = vmatpush1.msra.mxu0 %v240
    %242 = vmatprep.subr.mxu0 0.0
    %243 = vmatpush1.msra.mxu0 0.0
    %244 = vmatprep.subr.mxu0 0.0
    %245 = vmatpush1.msra.mxu0 0.0
    %246 = vmatprep.subr.mxu0 0.0
    %247 = vmatpush1.msra.mxu0 0.0
    %248 = vmatprep.subr.mxu0 0.0
    %249 = vmatpush1.msra.mxu0 0.0
    %250 = vmatprep.subr.mxu0 0.0
    %251 = vmatpush1.msra.mxu0 0.0
    %252 = vmatprep.subr.mxu0 0.0
    %253 = vmatpush1.msra.mxu0 0.0
    %254 = vmatprep.subr.mxu0 0.0
    %255 = vmatpush1.msra.mxu0 0.0
    %256 = vmatprep.subr.mxu0 0.0
    %257 = vmatpush1.msra.mxu0 0.0
    %258 = vmatprep.subr.mxu0 0.0
    %259 = vmatpush1.msra.mxu0 0.0
    %260 = vmatprep.subr.mxu0 0.0
    %261 = vmatpush1.msra.mxu0 0.0
    %262 = vmatprep.subr.mxu0 0.0
    %263 = vmatpush1.msra.mxu0 0.0
    %264 = vmatprep.subr.mxu0 0.0
    %265 = vmatpush1.msra.mxu0 0.0
    %266 = vmatprep.subr.mxu0 0.0
    %267 = vmatpush1.msra.mxu0 0.0
    %268 = vmatprep.subr.mxu0 0.0
    %269 = vmatpush1.msra.mxu0 0.0
    %270 = vmatprep.subr.mxu0 0.0
    %271 = vmatpush1.msra.mxu0 0.0
    %272 = vmatprep.subr.mxu0 0.0
    %273 = vmatpush1.msra.mxu0 0.0
    %274 = vmatprep.mubr.f32.mxu0 0.0
    %v275 = vand.u32 %v21, 4294901760
    %276 = vmatmul.mubr.f32.gmra.mrb[0].mxu0 %v275
    %v277 = vpop.f32.mrb[0].mxu0
    %v278 = vadd.f32 %v127, %v277
    %v279 = vpop.f32.mrb[0].mxu0
    %280 = vdwg.mxu0
    %281 = vmatprep.subr.mxu0 0.0
    %v282 = vand.u32 %v22, 4294901760
    %v283 = vsub.f32 %v22, %v282
    %284 = vmatpush1.msra.mxu0 %v283
    %285 = vmatprep.subr.mxu0 0.0
    %v286 = vand.u32 %v23, 4294901760
    %v287 = vsub.f32 %v23, %v286
    %288 = vmatpush1.msra.mxu0 %v287
    %289 = vmatprep.subr.mxu0 0.0
    %v290 = vand.u32 %v24, 4294901760
    %v291 = vsub.f32 %v24, %v290
    %292 = vmatpush1.msra.mxu0 %v291
    %293 = vmatprep.subr.mxu0 0.0
    %v294 = vand.u32 %v25, 4294901760
    %v295 = vsub.f32 %v25, %v294
    %296 = vmatpush1.msra.mxu0 %v295
    %297 = vmatprep.subr.mxu0 0.0
    %v298 = vand.u32 %v26, 4294901760
    %v299 = vsub.f32 %v26, %v298
    %300 = vmatpush1.msra.mxu0 %v299
    %301 = vmatprep.subr.mxu0 0.0
    %v302 = vand.u32 %v27, 4294901760
    %v303 = vsub.f32 %v27, %v302
    %304 = vmatpush1.msra.mxu0 %v303
    %305 = vmatprep.subr.mxu0 0.0
    %v306 = vand.u32 %v28, 4294901760
    %v307 = vsub.f32 %v28, %v306
    %308 = vmatpush1.msra.mxu0 %v307
    %309 = vmatprep.subr.mxu0 0.0
    %v310 = vand.u32 %v29, 4294901760
    %v311 = vsub.f32 %v29, %v310
    %312 = vmatpush1.msra.mxu0 %v311
    %313 = vmatprep.subr.mxu0 0.0
    %v314 = vand.u32 %v30, 4294901760
    %v315 = vsub.f32 %v30, %v314
    %316 = vmatpush1.msra.mxu0 %v315
    %317 = vmatprep.subr.mxu0 0.0
    %v318 = vand.u32 %v31, 4294901760
    %v319 = vsub.f32 %v31, %v318
    %320 = vmatpush1.msra.mxu0 %v319
    %321 = vmatprep.subr.mxu0 0.0
    %v322 = vand.u32 %v32, 4294901760
    %v323 = vsub.f32 %v32, %v322
    %324 = vmatpush1.msra.mxu0 %v323
    %325 = vmatprep.subr.mxu0 0.0
    %v326 = vand.u32 %v33, 4294901760
    %v327 = vsub.f32 %v33, %v326
    %328 = vmatpush1.msra.mxu0 %v327
    %329 = vmatprep.subr.mxu0 0.0
    %v330 = vand.u32 %v34, 4294901760
    %v331 = vsub.f32 %v34, %v330
    %332 = vmatpush1.msra.mxu0 %v331
    %333 = vmatprep.subr.mxu0 0.0
    %v334 = vand.u32 %v35, 4294901760
    %v335 = vsub.f32 %v35, %v334
    %336 = vmatpush1.msra.mxu0 %v335
    %337 = vmatprep.subr.mxu0 0.0
    %v338 = vand.u32 %v36, 4294901760
    %v339 = vsub.f32 %v36, %v338
    %340 = vmatpush1.msra.mxu0 %v339
    %341 = vmatprep.subr.mxu0 0.0
    %v342 = vand.u32 %v37, 4294901760
    %v343 = vsub.f32 %v37, %v342
    %344 = vmatpush1.msra.mxu0 %v343
    %345 = vmatprep.subr.mxu0 0.0
    %346 = vmatpush1.msra.mxu0 0.0
    %347 = vmatprep.subr.mxu0 0.0
    %348 = vmatpush1.msra.mxu0 0.0
    %349 = vmatprep.subr.mxu0 0.0
    %350 = vmatpush1.msra.mxu0 0.0
    %351 = vmatprep.subr.mxu0 0.0
    %352 = vmatpush1.msra.mxu0 0.0
    %353 = vmatprep.subr.mxu0 0.0
    %354 = vmatpush1.msra.mxu0 0.0
    %355 = vmatprep.subr.mxu0 0.0
    %356 = vmatpush1.msra.mxu0 0.0
    %357 = vmatprep.subr.mxu0 0.0
    %358 = vmatpush1.msra.mxu0 0.0
    %359 = vmatprep.subr.mxu0 0.0
    %360 = vmatpush1.msra.mxu0 0.0
    %361 = vmatprep.subr.mxu0 0.0
    %362 = vmatpush1.msra.mxu0 0.0
    %363 = vmatprep.subr.mxu0 0.0
    %364 = vmatpush1.msra.mxu0 0.0
    %365 = vmatprep.subr.mxu0 0.0
    %366 = vmatpush1.msra.mxu0 0.0
    %367 = vmatprep.subr.mxu0 0.0
    %368 = vmatpush1.msra.mxu0 0.0
    %369 = vmatprep.subr.mxu0 0.0
    %370 = vmatpush1.msra.mxu0 0.0
    %371 = vmatprep.subr.mxu0 0.0
    %372 = vmatpush1.msra.mxu0 0.0
    %373 = vmatprep.subr.mxu0 0.0
    %374 = vmatpush1.msra.mxu0 0.0
    %375 = vmatprep.subr.mxu0 0.0
    %376 = vmatpush1.msra.mxu0 0.0
    %377 = vmatprep.mubr.f32.mxu0 0.0
    %v378 = vand.u32 %v21, 4294901760
    %v379 = vsub.f32 %v21, %v378
    %380 = vmatmul.mubr.f32.gmra.mrb[0].mxu0 %v379
    %v381 = vpop.f32.mrb[0].mxu0
    %v382 = vadd.f32 %v278, %v381
    %v383 = vpop.f32.mrb[0].mxu0
    %384 = vdwg.mxu0
    %385 = vmatprep.subr.mxu0 0.0
    %v386 = vand.u32 %v22, 4294901760
    %387 = vmatpush1.msra.mxu0 %v386
    %388 = vmatprep.subr.mxu0 0.0
    %v389 = vand.u32 %v23, 4294901760
    %390 = vmatpush1.msra.mxu0 %v389
    %391 = vmatprep.subr.mxu0 0.0
    %v392 = vand.u32 %v24, 4294901760
    %393 = vmatpush1.msra.mxu0 %v392
    %394 = vmatprep.subr.mxu0 0.0
    %v395 = vand.u32 %v25, 4294901760
    %396 = vmatpush1.msra.mxu0 %v395
    %397 = vmatprep.subr.mxu0 0.0
    %v398 = vand.u32 %v26, 4294901760
    %399 = vmatpush1.msra.mxu0 %v398
    %400 = vmatprep.subr.mxu0 0.0
    %v401 = vand.u32 %v27, 4294901760
    %402 = vmatpush1.msra.mxu0 %v401
    %403 = vmatprep.subr.mxu0 0.0
    %v404 = vand.u32 %v28, 4294901760
    %405 = vmatpush1.msra.mxu0 %v404
    %406 = vmatprep.subr.mxu0 0.0
    %v407 = vand.u32 %v29, 4294901760
    %408 = vmatpush1.msra.mxu0 %v407
    %409 = vmatprep.subr.mxu0 0.0
    %v410 = vand.u32 %v30, 4294901760
    %411 = vmatpush1.msra.mxu0 %v410
    %412 = vmatprep.subr.mxu0 0.0
    %v413 = vand.u32 %v31, 4294901760
    %414 = vmatpush1.msra.mxu0 %v413
    %415 = vmatprep.subr.mxu0 0.0
    %v416 = vand.u32 %v32, 4294901760
    %417 = vmatpush1.msra.mxu0 %v416
    %418 = vmatprep.subr.mxu0 0.0
    %v419 = vand.u32 %v33, 4294901760
    %420 = vmatpush1.msra.mxu0 %v419
    %421 = vmatprep.subr.mxu0 0.0
    %v422 = vand.u32 %v34, 4294901760
    %423 = vmatpush1.msra.mxu0 %v422
    %424 = vmatprep.subr.mxu0 0.0
    %v425 = vand.u32 %v35, 4294901760
    %426 = vmatpush1.msra.mxu0 %v425
    %427 = vmatprep.subr.mxu0 0.0
    %v428 = vand.u32 %v36, 4294901760
    %429 = vmatpush1.msra.mxu0 %v428
    %430 = vmatprep.subr.mxu0 0.0
    %v431 = vand.u32 %v37, 4294901760
    %432 = vmatpush1.msra.mxu0 %v431
    %433 = vmatprep.subr.mxu0 0.0
    %434 = vmatpush1.msra.mxu0 0.0
    %435 = vmatprep.subr.mxu0 0.0
    %436 = vmatpush1.msra.mxu0 0.0
    %437 = vmatprep.subr.mxu0 0.0
    %438 = vmatpush1.msra.mxu0 0.0
    %439 = vmatprep.subr.mxu0 0.0
    %440 = vmatpush1.msra.mxu0 0.0
    %441 = vmatprep.subr.mxu0 0.0
    %442 = vmatpush1.msra.mxu0 0.0
    %443 = vmatprep.subr.mxu0 0.0
    %444 = vmatpush1.msra.mxu0 0.0
    %445 = vmatprep.subr.mxu0 0.0
    %446 = vmatpush1.msra.mxu0 0.0
    %447 = vmatprep.subr.mxu0 0.0
    %448 = vmatpush1.msra.mxu0 0.0
    %449 = vmatprep.subr.mxu0 0.0
    %450 = vmatpush1.msra.mxu0 0.0
    %451 = vmatprep.subr.mxu0 0.0
    %452 = vmatpush1.msra.mxu0 0.0
    %453 = vmatprep.subr.mxu0 0.0
    %454 = vmatpush1.msra.mxu0 0.0
    %455 = vmatprep.subr.mxu0 0.0
    %456 = vmatpush1.msra.mxu0 0.0
    %457 = vmatprep.subr.mxu0 0.0
    %458 = vmatpush1.msra.mxu0 0.0
    %459 = vmatprep.subr.mxu0 0.0
    %460 = vmatpush1.msra.mxu0 0.0
    %461 = vmatprep.subr.mxu0 0.0
    %462 = vmatpush1.msra.mxu0 0.0
    %463 = vmatprep.subr.mxu0 0.0
    %464 = vmatpush1.msra.mxu0 0.0
    %465 = vmatprep.mubr.f32.mxu0 0.0
    %v466 = vand.u32 %v21, 4294901760
    %v467 = vsub.f32 %v21, %v466
    %v468 = vand.u32 %v467, 4294901760
    %469 = vmatmul.mubr.f32.gmra.mrb[0].mxu0 %v468
    %v470 = vpop.f32.mrb[0].mxu0
    %v471 = vadd.f32 %v382, %v470
    %v472 = vpop.f32.mrb[0].mxu0
    %473 = vdwg.mxu0
    %474 = vmatprep.subr.mxu0 0.0
    %v475 = vand.u32 %v22, 4294901760
    %v476 = vsub.f32 %v22, %v475
    %v477 = vand.u32 %v476, 4294901760
    %478 = vmatpush1.msra.mxu0 %v477
    %479 = vmatprep.subr.mxu0 0.0
    %v480 = vand.u32 %v23, 4294901760
    %v481 = vsub.f32 %v23, %v480
    %v482 = vand.u32 %v481, 4294901760
    %483 = vmatpush1.msra.mxu0 %v482
    %484 = vmatprep.subr.mxu0 0.0
    %v485 = vand.u32 %v24, 4294901760
    %v486 = vsub.f32 %v24, %v485
    %v487 = vand.u32 %v486, 4294901760
    %488 = vmatpush1.msra.mxu0 %v487
    %489 = vmatprep.subr.mxu0 0.0
    %v490 = vand.u32 %v25, 4294901760
    %v491 = vsub.f32 %v25, %v490
    %v492 = vand.u32 %v491, 4294901760
    %493 = vmatpush1.msra.mxu0 %v492
    %494 = vmatprep.subr.mxu0 0.0
    %v495 = vand.u32 %v26, 4294901760
    %v496 = vsub.f32 %v26, %v495
    %v497 = vand.u32 %v496, 4294901760
    %498 = vmatpush1.msra.mxu0 %v497
    %499 = vmatprep.subr.mxu0 0.0
    %v500 = vand.u32 %v27, 4294901760
    %v501 = vsub.f32 %v27, %v500
    %v502 = vand.u32 %v501, 4294901760
    %503 = vmatpush1.msra.mxu0 %v502
    %504 = vmatprep.subr.mxu0 0.0
    %v505 = vand.u32 %v28, 4294901760
    %v506 = vsub.f32 %v28, %v505
    %v507 = vand.u32 %v506, 4294901760
    %508 = vmatpush1.msra.mxu0 %v507
    %509 = vmatprep.subr.mxu0 0.0
    %v510 = vand.u32 %v29, 4294901760
    %v511 = vsub.f32 %v29, %v510
    %v512 = vand.u32 %v511, 4294901760
    %513 = vmatpush1.msra.mxu0 %v512
    %514 = vmatprep.subr.mxu0 0.0
    %v515 = vand.u32 %v30, 4294901760
    %v516 = vsub.f32 %v30, %v515
    %v517 = vand.u32 %v516, 4294901760
    %518 = vmatpush1.msra.mxu0 %v517
    %519 = vmatprep.subr.mxu0 0.0
    %v520 = vand.u32 %v31, 4294901760
    %v521 = vsub.f32 %v31, %v520
    %v522 = vand.u32 %v521, 4294901760
    %523 = vmatpush1.msra.mxu0 %v522
    %524 = vmatprep.subr.mxu0 0.0
    %v525 = vand.u32 %v32, 4294901760
    %v526 = vsub.f32 %v32, %v525
    %v527 = vand.u32 %v526, 4294901760
    %528 = vmatpush1.msra.mxu0 %v527
    %529 = vmatprep.subr.mxu0 0.0
    %v530 = vand.u32 %v33, 4294901760
    %v531 = vsub.f32 %v33, %v530
    %v532 = vand.u32 %v531, 4294901760
    %533 = vmatpush1.msra.mxu0 %v532
    %534 = vmatprep.subr.mxu0 0.0
    %v535 = vand.u32 %v34, 4294901760
    %v536 = vsub.f32 %v34, %v535
    %v537 = vand.u32 %v536, 4294901760
    %538 = vmatpush1.msra.mxu0 %v537
    %539 = vmatprep.subr.mxu0 0.0
    %v540 = vand.u32 %v35, 4294901760
    %v541 = vsub.f32 %v35, %v540
    %v542 = vand.u32 %v541, 4294901760
    %543 = vmatpush1.msra.mxu0 %v542
    %544 = vmatprep.subr.mxu0 0.0
    %v545 = vand.u32 %v36, 4294901760
    %v546 = vsub.f32 %v36, %v545
    %v547 = vand.u32 %v546, 4294901760
    %548 = vmatpush1.msra.mxu0 %v547
    %549 = vmatprep.subr.mxu0 0.0
    %v550 = vand.u32 %v37, 4294901760
    %v551 = vsub.f32 %v37, %v550
    %v552 = vand.u32 %v551, 4294901760
    %553 = vmatpush1.msra.mxu0 %v552
    %554 = vmatprep.subr.mxu0 0.0
    %555 = vmatpush1.msra.mxu0 0.0
    %556 = vmatprep.subr.mxu0 0.0
    %557 = vmatpush1.msra.mxu0 0.0
    %558 = vmatprep.subr.mxu0 0.0
    %559 = vmatpush1.msra.mxu0 0.0
    %560 = vmatprep.subr.mxu0 0.0
    %561 = vmatpush1.msra.mxu0 0.0
    %562 = vmatprep.subr.mxu0 0.0
    %563 = vmatpush1.msra.mxu0 0.0
    %564 = vmatprep.subr.mxu0 0.0
    %565 = vmatpush1.msra.mxu0 0.0
    %566 = vmatprep.subr.mxu0 0.0
    %567 = vmatpush1.msra.mxu0 0.0
    %568 = vmatprep.subr.mxu0 0.0
    %569 = vmatpush1.msra.mxu0 0.0
    %570 = vmatprep.subr.mxu0 0.0
    %571 = vmatpush1.msra.mxu0 0.0
    %572 = vmatprep.subr.mxu0 0.0
    %573 = vmatpush1.msra.mxu0 0.0
    %574 = vmatprep.subr.mxu0 0.0
    %575 = vmatpush1.msra.mxu0 0.0
    %576 = vmatprep.subr.mxu0 0.0
    %577 = vmatpush1.msra.mxu0 0.0
    %578 = vmatprep.subr.mxu0 0.0
    %579 = vmatpush1.msra.mxu0 0.0
    %580 = vmatprep.subr.mxu0 0.0
    %581 = vmatpush1.msra.mxu0 0.0
    %582 = vmatprep.subr.mxu0 0.0
    %583 = vmatpush1.msra.mxu0 0.0
    %584 = vmatprep.subr.mxu0 0.0
    %585 = vmatpush1.msra.mxu0 0.0
    %586 = vmatprep.mubr.f32.mxu0 0.0
    %v587 = vand.u32 %v21, 4294901760
    %588 = vmatmul.mubr.f32.gmra.mrb[0].mxu0 %v587
    %v589 = vpop.f32.mrb[0].mxu0
    %v590 = vadd.f32 %v471, %v589
    %v591 = vpop.f32.mrb[0].mxu0
    %592 = vdwg.mxu0
    %593 = vmatprep.subr.mxu0 0.0
    %v594 = vand.u32 %v22, 4294901760
    %595 = vmatpush1.msra.mxu0 %v594
    %596 = vmatprep.subr.mxu0 0.0
    %v597 = vand.u32 %v23, 4294901760
    %598 = vmatpush1.msra.mxu0 %v597
    %599 = vmatprep.subr.mxu0 0.0
    %v600 = vand.u32 %v24, 4294901760
    %601 = vmatpush1.msra.mxu0 %v600
    %602 = vmatprep.subr.mxu0 0.0
    %v603 = vand.u32 %v25, 4294901760
    %604 = vmatpush1.msra.mxu0 %v603
    %605 = vmatprep.subr.mxu0 0.0
    %v606 = vand.u32 %v26, 4294901760
    %607 = vmatpush1.msra.mxu0 %v606
    %608 = vmatprep.subr.mxu0 0.0
    %v609 = vand.u32 %v27, 4294901760
    %610 = vmatpush1.msra.mxu0 %v609
    %611 = vmatprep.subr.mxu0 0.0
    %v612 = vand.u32 %v28, 4294901760
    %613 = vmatpush1.msra.mxu0 %v612
    %614 = vmatprep.subr.mxu0 0.0
    %v615 = vand.u32 %v29, 4294901760
    %616 = vmatpush1.msra.mxu0 %v615
    %617 = vmatprep.subr.mxu0 0.0
    %v618 = vand.u32 %v30, 4294901760
    %619 = vmatpush1.msra.mxu0 %v618
    %620 = vmatprep.subr.mxu0 0.0
    %v621 = vand.u32 %v31, 4294901760
    %622 = vmatpush1.msra.mxu0 %v621
    %623 = vmatprep.subr.mxu0 0.0
    %v624 = vand.u32 %v32, 4294901760
    %625 = vmatpush1.msra.mxu0 %v624
    %626 = vmatprep.subr.mxu0 0.0
    %v627 = vand.u32 %v33, 4294901760
    %628 = vmatpush1.msra.mxu0 %v627
    %629 = vmatprep.subr.mxu0 0.0
    %v630 = vand.u32 %v34, 4294901760
    %631 = vmatpush1.msra.mxu0 %v630
    %632 = vmatprep.subr.mxu0 0.0
    %v633 = vand.u32 %v35, 4294901760
    %634 = vmatpush1.msra.mxu0 %v633
    %635 = vmatprep.subr.mxu0 0.0
    %v636 = vand.u32 %v36, 4294901760
    %637 = vmatpush1.msra.mxu0 %v636
    %638 = vmatprep.subr.mxu0 0.0
    %v639 = vand.u32 %v37, 4294901760
    %640 = vmatpush1.msra.mxu0 %v639
    %641 = vmatprep.subr.mxu0 0.0
    %642 = vmatpush1.msra.mxu0 0.0
    %643 = vmatprep.subr.mxu0 0.0
    %644 = vmatpush1.msra.mxu0 0.0
    %645 = vmatprep.subr.mxu0 0.0
    %646 = vmatpush1.msra.mxu0 0.0
    %647 = vmatprep.subr.mxu0 0.0
    %648 = vmatpush1.msra.mxu0 0.0
    %649 = vmatprep.subr.mxu0 0.0
    %650 = vmatpush1.msra.mxu0 0.0
    %651 = vmatprep.subr.mxu0 0.0
    %652 = vmatpush1.msra.mxu0 0.0
    %653 = vmatprep.subr.mxu0 0.0
    %654 = vmatpush1.msra.mxu0 0.0
    %655 = vmatprep.subr.mxu0 0.0
    %656 = vmatpush1.msra.mxu0 0.0
    %657 = vmatprep.subr.mxu0 0.0
    %658 = vmatpush1.msra.mxu0 0.0
    %659 = vmatprep.subr.mxu0 0.0
    %660 = vmatpush1.msra.mxu0 0.0
    %661 = vmatprep.subr.mxu0 0.0
    %662 = vmatpush1.msra.mxu0 0.0
    %663 = vmatprep.subr.mxu0 0.0
    %664 = vmatpush1.msra.mxu0 0.0
    %665 = vmatprep.subr.mxu0 0.0
    %666 = vmatpush1.msra.mxu0 0.0
    %667 = vmatprep.subr.mxu0 0.0
    %668 = vmatpush1.msra.mxu0 0.0
    %669 = vmatprep.subr.mxu0 0.0
    %670 = vmatpush1.msra.mxu0 0.0
    %671 = vmatprep.subr.mxu0 0.0
    %672 = vmatpush1.msra.mxu0 0.0
    %673 = vmatprep.mubr.f32.mxu0 0.0
    %v674 = vand.u32 %v21, 4294901760
    %675 = vmatmul.mubr.f32.gmra.mrb[0].mxu0 %v674
    %v676 = vpop.f32.mrb[0].mxu0
    %v677 = vadd.f32 %v590, %v676
    %v678 = vpop.f32.mrb[0].mxu0
    %679 = vdwg.mxu0
    %v680 = vmul.f32 %v21, %v21
    %681 = vmatprep.subr.mxu0 0.0
    %v682 = vand.u32 %v22, 4294901760
    %683 = vmatpush1.msra.mxu0 %v682
    %684 = vmatprep.subr.mxu0 0.0
    %v685 = vand.u32 %v23, 4294901760
    %686 = vmatpush1.msra.mxu0 %v685
    %687 = vmatprep.subr.mxu0 0.0
    %v688 = vand.u32 %v24, 4294901760
    %689 = vmatpush1.msra.mxu0 %v688
    %690 = vmatprep.subr.mxu0 0.0
    %v691 = vand.u32 %v25, 4294901760
    %692 = vmatpush1.msra.mxu0 %v691
    %693 = vmatprep.subr.mxu0 0.0
    %v694 = vand.u32 %v26, 4294901760
    %695 = vmatpush1.msra.mxu0 %v694
    %696 = vmatprep.subr.mxu0 0.0
    %v697 = vand.u32 %v27, 4294901760
    %698 = vmatpush1.msra.mxu0 %v697
    %699 = vmatprep.subr.mxu0 0.0
    %v700 = vand.u32 %v28, 4294901760
    %701 = vmatpush1.msra.mxu0 %v700
    %702 = vmatprep.subr.mxu0 0.0
    %v703 = vand.u32 %v29, 4294901760
    %704 = vmatpush1.msra.mxu0 %v703
    %705 = vmatprep.subr.mxu0 0.0
    %v706 = vand.u32 %v30, 4294901760
    %707 = vmatpush1.msra.mxu0 %v706
    %708 = vmatprep.subr.mxu0 0.0
    %v709 = vand.u32 %v31, 4294901760
    %710 = vmatpush1.msra.mxu0 %v709
    %711 = vmatprep.subr.mxu0 0.0
    %v712 = vand.u32 %v32, 4294901760
    %713 = vmatpush1.msra.mxu0 %v712
    %714 = vmatprep.subr.mxu0 0.0
    %v715 = vand.u32 %v33, 4294901760
    %716 = vmatpush1.msra.mxu0 %v715
    %717 = vmatprep.subr.mxu0 0.0
    %v718 = vand.u32 %v34, 4294901760
    %719 = vmatpush1.msra.mxu0 %v718
    %720 = vmatprep.subr.mxu0 0.0
    %v721 = vand.u32 %v35, 4294901760
    %722 = vmatpush1.msra.mxu0 %v721
    %723 = vmatprep.subr.mxu0 0.0
    %v724 = vand.u32 %v36, 4294901760
    %725 = vmatpush1.msra.mxu0 %v724
    %726 = vmatprep.subr.mxu0 0.0
    %v727 = vand.u32 %v37, 4294901760
    %728 = vmatpush1.msra.mxu0 %v727
    %729 = vmatprep.subr.mxu0 0.0
    %730 = vmatpush1.msra.mxu0 0.0
    %731 = vmatprep.subr.mxu0 0.0
    %732 = vmatpush1.msra.mxu0 0.0
    %733 = vmatprep.subr.mxu0 0.0
    %734 = vmatpush1.msra.mxu0 0.0
    %735 = vmatprep.subr.mxu0 0.0
    %736 = vmatpush1.msra.mxu0 0.0
    %737 = vmatprep.subr.mxu0 0.0
    %738 = vmatpush1.msra.mxu0 0.0
    %739 = vmatprep.subr.mxu0 0.0
    %740 = vmatpush1.msra.mxu0 0.0
    %741 = vmatprep.subr.mxu0 0.0
    %742 = vmatpush1.msra.mxu0 0.0
    %743 = vmatprep.subr.mxu0 0.0
    %744 = vmatpush1.msra.mxu0 0.0
    %745 = vmatprep.subr.mxu0 0.0
    %746 = vmatpush1.msra.mxu0 0.0
    %747 = vmatprep.subr.mxu0 0.0
    %748 = vmatpush1.msra.mxu0 0.0
    %749 = vmatprep.subr.mxu0 0.0
    %750 = vmatpush1.msra.mxu0 0.0
    %751 = vmatprep.subr.mxu0 0.0
    %752 = vmatpush1.msra.mxu0 0.0
    %753 = vmatprep.subr.mxu0 0.0
    %754 = vmatpush1.msra.mxu0 0.0
    %755 = vmatprep.subr.mxu0 0.0
    %756 = vmatpush1.msra.mxu0 0.0
    %757 = vmatprep.subr.mxu0 0.0
    %758 = vmatpush1.msra.mxu0 0.0
    %759 = vmatprep.subr.mxu0 0.0
    %760 = vmatpush1.msra.mxu0 0.0
    %761 = vmatprep.mubr.f32.mxu0 0.0
    %v762 = vand.u32 %v680, 4294901760
    %v763 = vsub.f32 %v680, %v762
    %v764 = vand.u32 %v763, 4294901760
    %v765 = vsub.f32 %v763, %v764
    %v766 = vand.u32 %v765, 4294901760
    %767 = vmatmul.mubr.f32.gmra.mrb[0].mxu0 %v766
    %v768 = vpop.f32.mrb[0].mxu0
    %v769 = vadd.f32 0.0, %v768
    %v770 = vpop.f32.mrb[0].mxu0
    %771 = vdwg.mxu0
    %772 = vmatprep.subr.mxu0 0.0
    %v773 = vand.u32 %v22, 4294901760
    %v774 = vsub.f32 %v22, %v773
    %v775 = vand.u32 %v774, 4294901760
    %v776 = vsub.f32 %v774, %v775
    %v777 = vand.u32 %v776, 4294901760
    %778 = vmatpush1.msra.mxu0 %v777
    %779 = vmatprep.subr.mxu0 0.0
    %v780 = vand.u32 %v23, 4294901760
    %v781 = vsub.f32 %v23, %v780
    %v782 = vand.u32 %v781, 4294901760
    %v783 = vsub.f32 %v781, %v782
    %v784 = vand.u32 %v783, 4294901760
    %785 = vmatpush1.msra.mxu0 %v784
    %786 = vmatprep.subr.mxu0 0.0
    %v787 = vand.u32 %v24, 4294901760
    %v788 = vsub.f32 %v24, %v787
    %v789 = vand.u32 %v788, 4294901760
    %v790 = vsub.f32 %v788, %v789
    %v791 = vand.u32 %v790, 4294901760
    %792 = vmatpush1.msra.mxu0 %v791
    %793 = vmatprep.subr.mxu0 0.0
    %v794 = vand.u32 %v25, 4294901760
    %v795 = vsub.f32 %v25, %v794
    %v796 = vand.u32 %v795, 4294901760
    %v797 = vsub.f32 %v795, %v796
    %v798 = vand.u32 %v797, 4294901760
    %799 = vmatpush1.msra.mxu0 %v798
    %800 = vmatprep.subr.mxu0 0.0
    %v801 = vand.u32 %v26, 4294901760
    %v802 = vsub.f32 %v26, %v801
    %v803 = vand.u32 %v802, 4294901760
    %v804 = vsub.f32 %v802, %v803
    %v805 = vand.u32 %v804, 4294901760
    %806 = vmatpush1.msra.mxu0 %v805
    %807 = vmatprep.subr.mxu0 0.0
    %v808 = vand.u32 %v27, 4294901760
    %v809 = vsub.f32 %v27, %v808
    %v810 = vand.u32 %v809, 4294901760
    %v811 = vsub.f32 %v809, %v810
    %v812 = vand.u32 %v811, 4294901760
    %813 = vmatpush1.msra.mxu0 %v812
    %814 = vmatprep.subr.mxu0 0.0
    %v815 = vand.u32 %v28, 4294901760
    %v816 = vsub.f32 %v28, %v815
    %v817 = vand.u32 %v816, 4294901760
    %v818 = vsub.f32 %v816, %v817
    %v819 = vand.u32 %v818, 4294901760
    %820 = vmatpush1.msra.mxu0 %v819
    %821 = vmatprep.subr.mxu0 0.0
    %v822 = vand.u32 %v29, 4294901760
    %v823 = vsub.f32 %v29, %v822
    %v824 = vand.u32 %v823, 4294901760
    %v825 = vsub.f32 %v823, %v824
    %v826 = vand.u32 %v825, 4294901760
    %827 = vmatpush1.msra.mxu0 %v826
    %828 = vmatprep.subr.mxu0 0.0
    %v829 = vand.u32 %v30, 4294901760
    %v830 = vsub.f32 %v30, %v829
    %v831 = vand.u32 %v830, 4294901760
    %v832 = vsub.f32 %v830, %v831
    %v833 = vand.u32 %v832, 4294901760
    %834 = vmatpush1.msra.mxu0 %v833
    %835 = vmatprep.subr.mxu0 0.0
    %v836 = vand.u32 %v31, 4294901760
    %v837 = vsub.f32 %v31, %v836
    %v838 = vand.u32 %v837, 4294901760
    %v839 = vsub.f32 %v837, %v838
    %v840 = vand.u32 %v839, 4294901760
    %841 = vmatpush1.msra.mxu0 %v840
    %842 = vmatprep.subr.mxu0 0.0
    %v843 = vand.u32 %v32, 4294901760
    %v844 = vsub.f32 %v32, %v843
    %v845 = vand.u32 %v844, 4294901760
    %v846 = vsub.f32 %v844, %v845
    %v847 = vand.u32 %v846, 4294901760
    %848 = vmatpush1.msra.mxu0 %v847
    %849 = vmatprep.subr.mxu0 0.0
    %v850 = vand.u32 %v33, 4294901760
    %v851 = vsub.f32 %v33, %v850
    %v852 = vand.u32 %v851, 4294901760
    %v853 = vsub.f32 %v851, %v852
    %v854 = vand.u32 %v853, 4294901760
    %855 = vmatpush1.msra.mxu0 %v854
    %856 = vmatprep.subr.mxu0 0.0
    %v857 = vand.u32 %v34, 4294901760
    %v858 = vsub.f32 %v34, %v857
    %v859 = vand.u32 %v858, 4294901760
    %v860 = vsub.f32 %v858, %v859
    %v861 = vand.u32 %v860, 4294901760
    %862 = vmatpush1.msra.mxu0 %v861
    %863 = vmatprep.subr.mxu0 0.0
    %v864 = vand.u32 %v35, 4294901760
    %v865 = vsub.f32 %v35, %v864
    %v866 = vand.u32 %v865, 4294901760
    %v867 = vsub.f32 %v865, %v866
    %v868 = vand.u32 %v867, 4294901760
    %869 = vmatpush1.msra.mxu0 %v868
    %870 = vmatprep.subr.mxu0 0.0
    %v871 = vand.u32 %v36, 4294901760
    %v872 = vsub.f32 %v36, %v871
    %v873 = vand.u32 %v872, 4294901760
    %v874 = vsub.f32 %v872, %v873
    %v875 = vand.u32 %v874, 4294901760
    %876 = vmatpush1.msra.mxu0 %v875
    %877 = vmatprep.subr.mxu0 0.0
    %v878 = vand.u32 %v37, 4294901760
    %v879 = vsub.f32 %v37, %v878
    %v880 = vand.u32 %v879, 4294901760
    %v881 = vsub.f32 %v879, %v880
    %v882 = vand.u32 %v881, 4294901760
    %883 = vmatpush1.msra.mxu0 %v882
    %884 = vmatprep.subr.mxu0 0.0
    %885 = vmatpush1.msra.mxu0 0.0
    %886 = vmatprep.subr.mxu0 0.0
    %887 = vmatpush1.msra.mxu0 0.0
    %888 = vmatprep.subr.mxu0 0.0
    %889 = vmatpush1.msra.mxu0 0.0
    %890 = vmatprep.subr.mxu0 0.0
    %891 = vmatpush1.msra.mxu0 0.0
    %892 = vmatprep.subr.mxu0 0.0
    %893 = vmatpush1.msra.mxu0 0.0
    %894 = vmatprep.subr.mxu0 0.0
    %895 = vmatpush1.msra.mxu0 0.0
    %896 = vmatprep.subr.mxu0 0.0
    %897 = vmatpush1.msra.mxu0 0.0
    %898 = vmatprep.subr.mxu0 0.0
    %899 = vmatpush1.msra.mxu0 0.0
    %900 = vmatprep.subr.mxu0 0.0
    %901 = vmatpush1.msra.mxu0 0.0
    %902 = vmatprep.subr.mxu0 0.0
    %903 = vmatpush1.msra.mxu0 0.0
    %904 = vmatprep.subr.mxu0 0.0
    %905 = vmatpush1.msra.mxu0 0.0
    %906 = vmatprep.subr.mxu0 0.0
    %907 = vmatpush1.msra.mxu0 0.0
    %908 = vmatprep.subr.mxu0 0.0
    %909 = vmatpush1.msra.mxu0 0.0
    %910 = vmatprep.subr.mxu0 0.0
    %911 = vmatpush1.msra.mxu0 0.0
    %912 = vmatprep.subr.mxu0 0.0
    %913 = vmatpush1.msra.mxu0 0.0
    %914 = vmatprep.subr.mxu0 0.0
    %915 = vmatpush1.msra.mxu0 0.0
    %916 = vmatprep.mubr.f32.mxu0 0.0
    %v917 = vand.u32 %v680, 4294901760
    %918 = vmatmul.mubr.f32.gmra.mrb[0].mxu0 %v917
    %v919 = vpop.f32.mrb[0].mxu0
    %v920 = vadd.f32 %v769, %v919
    %v921 = vpop.f32.mrb[0].mxu0
    %922 = vdwg.mxu0
    %923 = vmatprep.subr.mxu0 0.0
    %v924 = vand.u32 %v22, 4294901760
    %v925 = vsub.f32 %v22, %v924
    %926 = vmatpush1.msra.mxu0 %v925
    %927 = vmatprep.subr.mxu0 0.0
    %v928 = vand.u32 %v23, 4294901760
    %v929 = vsub.f32 %v23, %v928
    %930 = vmatpush1.msra.mxu0 %v929
    %931 = vmatprep.subr.mxu0 0.0
    %v932 = vand.u32 %v24, 4294901760
    %v933 = vsub.f32 %v24, %v932
    %934 = vmatpush1.msra.mxu0 %v933
    %935 = vmatprep.subr.mxu0 0.0
    %v936 = vand.u32 %v25, 4294901760
    %v937 = vsub.f32 %v25, %v936
    %938 = vmatpush1.msra.mxu0 %v937
    %939 = vmatprep.subr.mxu0 0.0
    %v940 = vand.u32 %v26, 4294901760
    %v941 = vsub.f32 %v26, %v940
    %942 = vmatpush1.msra.mxu0 %v941
    %943 = vmatprep.subr.mxu0 0.0
    %v944 = vand.u32 %v27, 4294901760
    %v945 = vsub.f32 %v27, %v944
    %946 = vmatpush1.msra.mxu0 %v945
    %947 = vmatprep.subr.mxu0 0.0
    %v948 = vand.u32 %v28, 4294901760
    %v949 = vsub.f32 %v28, %v948
    %950 = vmatpush1.msra.mxu0 %v949
    %951 = vmatprep.subr.mxu0 0.0
    %v952 = vand.u32 %v29, 4294901760
    %v953 = vsub.f32 %v29, %v952
    %954 = vmatpush1.msra.mxu0 %v953
    %955 = vmatprep.subr.mxu0 0.0
    %v956 = vand.u32 %v30, 4294901760
    %v957 = vsub.f32 %v30, %v956
    %958 = vmatpush1.msra.mxu0 %v957
    %959 = vmatprep.subr.mxu0 0.0
    %v960 = vand.u32 %v31, 4294901760
    %v961 = vsub.f32 %v31, %v960
    %962 = vmatpush1.msra.mxu0 %v961
    %963 = vmatprep.subr.mxu0 0.0
    %v964 = vand.u32 %v32, 4294901760
    %v965 = vsub.f32 %v32, %v964
    %966 = vmatpush1.msra.mxu0 %v965
    %967 = vmatprep.subr.mxu0 0.0
    %v968 = vand.u32 %v33, 4294901760
    %v969 = vsub.f32 %v33, %v968
    %970 = vmatpush1.msra.mxu0 %v969
    %971 = vmatprep.subr.mxu0 0.0
    %v972 = vand.u32 %v34, 4294901760
    %v973 = vsub.f32 %v34, %v972
    %974 = vmatpush1.msra.mxu0 %v973
    %975 = vmatprep.subr.mxu0 0.0
    %v976 = vand.u32 %v35, 4294901760
    %v977 = vsub.f32 %v35, %v976
    %978 = vmatpush1.msra.mxu0 %v977
    %979 = vmatprep.subr.mxu0 0.0
    %v980 = vand.u32 %v36, 4294901760
    %v981 = vsub.f32 %v36, %v980
    %982 = vmatpush1.msra.mxu0 %v981
    %983 = vmatprep.subr.mxu0 0.0
    %v984 = vand.u32 %v37, 4294901760
    %v985 = vsub.f32 %v37, %v984
    %986 = vmatpush1.msra.mxu0 %v985
    %987 = vmatprep.subr.mxu0 0.0
    %988 = vmatpush1.msra.mxu0 0.0
    %989 = vmatprep.subr.mxu0 0.0
    %990 = vmatpush1.msra.mxu0 0.0
    %991 = vmatprep.subr.mxu0 0.0
    %992 = vmatpush1.msra.mxu0 0.0
    %993 = vmatprep.subr.mxu0 0.0
    %994 = vmatpush1.msra.mxu0 0.0
    %995 = vmatprep.subr.mxu0 0.0
    %996 = vmatpush1.msra.mxu0 0.0
    %997 = vmatprep.subr.mxu0 0.0
    %998 = vmatpush1.msra.mxu0 0.0
    %999 = vmatprep.subr.mxu0 0.0
    %1000 = vmatpush1.msra.mxu0 0.0
    %1001 = vmatprep.subr.mxu0 0.0
    %1002 = vmatpush1.msra.mxu0 0.0
    %1003 = vmatprep.subr.mxu0 0.0
    %1004 = vmatpush1.msra.mxu0 0.0
    %1005 = vmatprep.subr.mxu0 0.0
    %1006 = vmatpush1.msra.mxu0 0.0
    %1007 = vmatprep.subr.mxu0 0.0
    %1008 = vmatpush1.msra.mxu0 0.0
    %1009 = vmatprep.subr.mxu0 0.0
    %1010 = vmatpush1.msra.mxu0 0.0
    %1011 = vmatprep.subr.mxu0 0.0
    %1012 = vmatpush1.msra.mxu0 0.0
    %1013 = vmatprep.subr.mxu0 0.0
    %1014 = vmatpush1.msra.mxu0 0.0
    %1015 = vmatprep.subr.mxu0 0.0
    %1016 = vmatpush1.msra.mxu0 0.0
    %1017 = vmatprep.subr.mxu0 0.0
    %1018 = vmatpush1.msra.mxu0 0.0
    %1019 = vmatprep.mubr.f32.mxu0 0.0
    %v1020 = vand.u32 %v680, 4294901760
    %v1021 = vsub.f32 %v680, %v1020
    %1022 = vmatmul.mubr.f32.gmra.mrb[0].mxu0 %v1021
    %v1023 = vpop.f32.mrb[0].mxu0
    %v1024 = vadd.f32 %v920, %v1023
    %v1025 = vpop.f32.mrb[0].mxu0
    %1026 = vdwg.mxu0
    %1027 = vmatprep.subr.mxu0 0.0
    %v1028 = vand.u32 %v22, 4294901760
    %1029 = vmatpush1.msra.mxu0 %v1028
    %1030 = vmatprep.subr.mxu0 0.0
    %v1031 = vand.u32 %v23, 4294901760
    %1032 = vmatpush1.msra.mxu0 %v1031
    %1033 = vmatprep.subr.mxu0 0.0
    %v1034 = vand.u32 %v24, 4294901760
    %1035 = vmatpush1.msra.mxu0 %v1034
    %1036 = vmatprep.subr.mxu0 0.0
    %v1037 = vand.u32 %v25, 4294901760
    %1038 = vmatpush1.msra.mxu0 %v1037
    %1039 = vmatprep.subr.mxu0 0.0
    %v1040 = vand.u32 %v26, 4294901760
    %1041 = vmatpush1.msra.mxu0 %v1040
    %1042 = vmatprep.subr.mxu0 0.0
    %v1043 = vand.u32 %v27, 4294901760
    %1044 = vmatpush1.msra.mxu0 %v1043
    %1045 = vmatprep.subr.mxu0 0.0
    %v1046 = vand.u32 %v28, 4294901760
    %1047 = vmatpush1.msra.mxu0 %v1046
    %1048 = vmatprep.subr.mxu0 0.0
    %v1049 = vand.u32 %v29, 4294901760
    %1050 = vmatpush1.msra.mxu0 %v1049
    %1051 = vmatprep.subr.mxu0 0.0
    %v1052 = vand.u32 %v30, 4294901760
    %1053 = vmatpush1.msra.mxu0 %v1052
    %1054 = vmatprep.subr.mxu0 0.0
    %v1055 = vand.u32 %v31, 4294901760
    %1056 = vmatpush1.msra.mxu0 %v1055
    %1057 = vmatprep.subr.mxu0 0.0
    %v1058 = vand.u32 %v32, 4294901760
    %1059 = vmatpush1.msra.mxu0 %v1058
    %1060 = vmatprep.subr.mxu0 0.0
    %v1061 = vand.u32 %v33, 4294901760
    %1062 = vmatpush1.msra.mxu0 %v1061
    %1063 = vmatprep.subr.mxu0 0.0
    %v1064 = vand.u32 %v34, 4294901760
    %1065 = vmatpush1.msra.mxu0 %v1064
    %1066 = vmatprep.subr.mxu0 0.0
    %v1067 = vand.u32 %v35, 4294901760
    %1068 = vmatpush1.msra.mxu0 %v1067
    %1069 = vmatprep.subr.mxu0 0.0
    %v1070 = vand.u32 %v36, 4294901760
    %1071 = vmatpush1.msra.mxu0 %v1070
    %1072 = vmatprep.subr.mxu0 0.0
    %v1073 = vand.u32 %v37, 4294901760
    %1074 = vmatpush1.msra.mxu0 %v1073
    %1075 = vmatprep.subr.mxu0 0.0
    %1076 = vmatpush1.msra.mxu0 0.0
    %1077 = vmatprep.subr.mxu0 0.0
    %1078 = vmatpush1.msra.mxu0 0.0
    %1079 = vmatprep.subr.mxu0 0.0
    %1080 = vmatpush1.msra.mxu0 0.0
    %1081 = vmatprep.subr.mxu0 0.0
    %1082 = vmatpush1.msra.mxu0 0.0
    %1083 = vmatprep.subr.mxu0 0.0
    %1084 = vmatpush1.msra.mxu0 0.0
    %1085 = vmatprep.subr.mxu0 0.0
    %1086 = vmatpush1.msra.mxu0 0.0
    %1087 = vmatprep.subr.mxu0 0.0
    %1088 = vmatpush1.msra.mxu0 0.0
    %1089 = vmatprep.subr.mxu0 0.0
    %1090 = vmatpush1.msra.mxu0 0.0
    %1091 = vmatprep.subr.mxu0 0.0
    %1092 = vmatpush1.msra.mxu0 0.0
    %1093 = vmatprep.subr.mxu0 0.0
    %1094 = vmatpush1.msra.mxu0 0.0
    %1095 = vmatprep.subr.mxu0 0.0
    %1096 = vmatpush1.msra.mxu0 0.0
    %1097 = vmatprep.subr.mxu0 0.0
    %1098 = vmatpush1.msra.mxu0 0.0
    %1099 = vmatprep.subr.mxu0 0.0
    %1100 = vmatpush1.msra.mxu0 0.0
    %1101 = vmatprep.subr.mxu0 0.0
    %1102 = vmatpush1.msra.mxu0 0.0
    %1103 = vmatprep.subr.mxu0 0.0
    %1104 = vmatpush1.msra.mxu0 0.0
    %1105 = vmatprep.subr.mxu0 0.0
    %1106 = vmatpush1.msra.mxu0 0.0
    %1107 = vmatprep.mubr.f32.mxu0 0.0
    %v1108 = vand.u32 %v680, 4294901760
    %v1109 = vsub.f32 %v680, %v1108
    %v1110 = vand.u32 %v1109, 4294901760
    %1111 = vmatmul.mubr.f32.gmra.mrb[0].mxu0 %v1110
    %v1112 = vpop.f32.mrb[0].mxu0
    %v1113 = vadd.f32 %v1024, %v1112
    %v1114 = vpop.f32.mrb[0].mxu0
    %1115 = vdwg.mxu0
    %1116 = vmatprep.subr.mxu0 0.0
    %v1117 = vand.u32 %v22, 4294901760
    %v1118 = vsub.f32 %v22, %v1117
    %v1119 = vand.u32 %v1118, 4294901760
    %1120 = vmatpush1.msra.mxu0 %v1119
    %1121 = vmatprep.subr.mxu0 0.0
    %v1122 = vand.u32 %v23, 4294901760
    %v1123 = vsub.f32 %v23, %v1122
    %v1124 = vand.u32 %v1123, 4294901760
    %1125 = vmatpush1.msra.mxu0 %v1124
    %1126 = vmatprep.subr.mxu0 0.0
    %v1127 = vand.u32 %v24, 4294901760
    %v1128 = vsub.f32 %v24, %v1127
    %v1129 = vand.u32 %v1128, 4294901760
    %1130 = vmatpush1.msra.mxu0 %v1129
    %1131 = vmatprep.subr.mxu0 0.0
    %v1132 = vand.u32 %v25, 4294901760
    %v1133 = vsub.f32 %v25, %v1132
    %v1134 = vand.u32 %v1133, 4294901760
    %1135 = vmatpush1.msra.mxu0 %v1134
    %1136 = vmatprep.subr.mxu0 0.0
    %v1137 = vand.u32 %v26, 4294901760
    %v1138 = vsub.f32 %v26, %v1137
    %v1139 = vand.u32 %v1138, 4294901760
    %1140 = vmatpush1.msra.mxu0 %v1139
    %1141 = vmatprep.subr.mxu0 0.0
    %v1142 = vand.u32 %v27, 4294901760
    %v1143 = vsub.f32 %v27, %v1142
    %v1144 = vand.u32 %v1143, 4294901760
    %1145 = vmatpush1.msra.mxu0 %v1144
    %1146 = vmatprep.subr.mxu0 0.0
    %v1147 = vand.u32 %v28, 4294901760
    %v1148 = vsub.f32 %v28, %v1147
    %v1149 = vand.u32 %v1148, 4294901760
    %1150 = vmatpush1.msra.mxu0 %v1149
    %1151 = vmatprep.subr.mxu0 0.0
    %v1152 = vand.u32 %v29, 4294901760
    %v1153 = vsub.f32 %v29, %v1152
    %v1154 = vand.u32 %v1153, 4294901760
    %1155 = vmatpush1.msra.mxu0 %v1154
    %1156 = vmatprep.subr.mxu0 0.0
    %v1157 = vand.u32 %v30, 4294901760
    %v1158 = vsub.f32 %v30, %v1157
    %v1159 = vand.u32 %v1158, 4294901760
    %1160 = vmatpush1.msra.mxu0 %v1159
    %1161 = vmatprep.subr.mxu0 0.0
    %v1162 = vand.u32 %v31, 4294901760
    %v1163 = vsub.f32 %v31, %v1162
    %v1164 = vand.u32 %v1163, 4294901760
    %1165 = vmatpush1.msra.mxu0 %v1164
    %1166 = vmatprep.subr.mxu0 0.0
    %v1167 = vand.u32 %v32, 4294901760
    %v1168 = vsub.f32 %v32, %v1167
    %v1169 = vand.u32 %v1168, 4294901760
    %1170 = vmatpush1.msra.mxu0 %v1169
    %1171 = vmatprep.subr.mxu0 0.0
    %v1172 = vand.u32 %v33, 4294901760
    %v1173 = vsub.f32 %v33, %v1172
    %v1174 = vand.u32 %v1173, 4294901760
    %1175 = vmatpush1.msra.mxu0 %v1174
    %1176 = vmatprep.subr.mxu0 0.0
    %v1177 = vand.u32 %v34, 4294901760
    %v1178 = vsub.f32 %v34, %v1177
    %v1179 = vand.u32 %v1178, 4294901760
    %1180 = vmatpush1.msra.mxu0 %v1179
    %1181 = vmatprep.subr.mxu0 0.0
    %v1182 = vand.u32 %v35, 4294901760
    %v1183 = vsub.f32 %v35, %v1182
    %v1184 = vand.u32 %v1183, 4294901760
    %1185 = vmatpush1.msra.mxu0 %v1184
    %1186 = vmatprep.subr.mxu0 0.0
    %v1187 = vand.u32 %v36, 4294901760
    %v1188 = vsub.f32 %v36, %v1187
    %v1189 = vand.u32 %v1188, 4294901760
    %1190 = vmatpush1.msra.mxu0 %v1189
    %1191 = vmatprep.subr.mxu0 0.0
    %v1192 = vand.u32 %v37, 4294901760
    %v1193 = vsub.f32 %v37, %v1192
    %v1194 = vand.u32 %v1193, 4294901760
    %1195 = vmatpush1.msra.mxu0 %v1194
    %1196 = vmatprep.subr.mxu0 0.0
    %1197 = vmatpush1.msra.mxu0 0.0
    %1198 = vmatprep.subr.mxu0 0.0
    %1199 = vmatpush1.msra.mxu0 0.0
    %1200 = vmatprep.subr.mxu0 0.0
    %1201 = vmatpush1.msra.mxu0 0.0
    %1202 = vmatprep.subr.mxu0 0.0
    %1203 = vmatpush1.msra.mxu0 0.0
    %1204 = vmatprep.subr.mxu0 0.0
    %1205 = vmatpush1.msra.mxu0 0.0
    %1206 = vmatprep.subr.mxu0 0.0
    %1207 = vmatpush1.msra.mxu0 0.0
    %1208 = vmatprep.subr.mxu0 0.0
    %1209 = vmatpush1.msra.mxu0 0.0
    %1210 = vmatprep.subr.mxu0 0.0
    %1211 = vmatpush1.msra.mxu0 0.0
    %1212 = vmatprep.subr.mxu0 0.0
    %1213 = vmatpush1.msra.mxu0 0.0
    %1214 = vmatprep.subr.mxu0 0.0
    %1215 = vmatpush1.msra.mxu0 0.0
    %1216 = vmatprep.subr.mxu0 0.0
    %1217 = vmatpush1.msra.mxu0 0.0
    %1218 = vmatprep.subr.mxu0 0.0
    %1219 = vmatpush1.msra.mxu0 0.0
    %1220 = vmatprep.subr.mxu0 0.0
    %1221 = vmatpush1.msra.mxu0 0.0
    %1222 = vmatprep.subr.mxu0 0.0
    %1223 = vmatpush1.msra.mxu0 0.0
    %1224 = vmatprep.subr.mxu0 0.0
    %1225 = vmatpush1.msra.mxu0 0.0
    %1226 = vmatprep.subr.mxu0 0.0
    %1227 = vmatpush1.msra.mxu0 0.0
    %1228 = vmatprep.mubr.f32.mxu0 0.0
    %v1229 = vand.u32 %v680, 4294901760
    %1230 = vmatmul.mubr.f32.gmra.mrb[0].mxu0 %v1229
    %v1231 = vpop.f32.mrb[0].mxu0
    %v1232 = vadd.f32 %v1113, %v1231
    %v1233 = vpop.f32.mrb[0].mxu0
    %1234 = vdwg.mxu0
    %1235 = vmatprep.subr.mxu0 0.0
    %v1236 = vand.u32 %v22, 4294901760
    %1237 = vmatpush1.msra.mxu0 %v1236
    %1238 = vmatprep.subr.mxu0 0.0
    %v1239 = vand.u32 %v23, 4294901760
    %1240 = vmatpush1.msra.mxu0 %v1239
    %1241 = vmatprep.subr.mxu0 0.0
    %v1242 = vand.u32 %v24, 4294901760
    %1243 = vmatpush1.msra.mxu0 %v1242
    %1244 = vmatprep.subr.mxu0 0.0
    %v1245 = vand.u32 %v25, 4294901760
    %1246 = vmatpush1.msra.mxu0 %v1245
    %1247 = vmatprep.subr.mxu0 0.0
    %v1248 = vand.u32 %v26, 4294901760
    %1249 = vmatpush1.msra.mxu0 %v1248
    %1250 = vmatprep.subr.mxu0 0.0
    %v1251 = vand.u32 %v27, 4294901760
    %1252 = vmatpush1.msra.mxu0 %v1251
    %1253 = vmatprep.subr.mxu0 0.0
    %v1254 = vand.u32 %v28, 4294901760
    %1255 = vmatpush1.msra.mxu0 %v1254
    %1256 = vmatprep.subr.mxu0 0.0
    %v1257 = vand.u32 %v29, 4294901760
    %1258 = vmatpush1.msra.mxu0 %v1257
    %1259 = vmatprep.subr.mxu0 0.0
    %v1260 = vand.u32 %v30, 4294901760
    %1261 = vmatpush1.msra.mxu0 %v1260
    %1262 = vmatprep.subr.mxu0 0.0
    %v1263 = vand.u32 %v31, 4294901760
    %1264 = vmatpush1.msra.mxu0 %v1263
    %1265 = vmatprep.subr.mxu0 0.0
    %v1266 = vand.u32 %v32, 4294901760
    %1267 = vmatpush1.msra.mxu0 %v1266
    %1268 = vmatprep.subr.mxu0 0.0
    %v1269 = vand.u32 %v33, 4294901760
    %1270 = vmatpush1.msra.mxu0 %v1269
    %1271 = vmatprep.subr.mxu0 0.0
    %v1272 = vand.u32 %v34, 4294901760
    %1273 = vmatpush1.msra.mxu0 %v1272
    %1274 = vmatprep.subr.mxu0 0.0
    %v1275 = vand.u32 %v35, 4294901760
    %1276 = vmatpush1.msra.mxu0 %v1275
    %1277 = vmatprep.subr.mxu0 0.0
    %v1278 = vand.u32 %v36, 4294901760
    %1279 = vmatpush1.msra.mxu0 %v1278
    %1280 = vmatprep.subr.mxu0 0.0
    %v1281 = vand.u32 %v37, 4294901760
    %1282 = vmatpush1.msra.mxu0 %v1281
    %1283 = vmatprep.subr.mxu0 0.0
    %1284 = vmatpush1.msra.mxu0 0.0
    %1285 = vmatprep.subr.mxu0 0.0
    %1286 = vmatpush1.msra.mxu0 0.0
    %1287 = vmatprep.subr.mxu0 0.0
    %1288 = vmatpush1.msra.mxu0 0.0
    %1289 = vmatprep.subr.mxu0 0.0
    %1290 = vmatpush1.msra.mxu0 0.0
    %1291 = vmatprep.subr.mxu0 0.0
    %1292 = vmatpush1.msra.mxu0 0.0
    %1293 = vmatprep.subr.mxu0 0.0
    %1294 = vmatpush1.msra.mxu0 0.0
    %1295 = vmatprep.subr.mxu0 0.0
    %1296 = vmatpush1.msra.mxu0 0.0
    %1297 = vmatprep.subr.mxu0 0.0
    %1298 = vmatpush1.msra.mxu0 0.0
    %1299 = vmatprep.subr.mxu0 0.0
    %1300 = vmatpush1.msra.mxu0 0.0
    %1301 = vmatprep.subr.mxu0 0.0
    %1302 = vmatpush1.msra.mxu0 0.0
    %1303 = vmatprep.subr.mxu0 0.0
    %1304 = vmatpush1.msra.mxu0 0.0
    %1305 = vmatprep.subr.mxu0 0.0
    %1306 = vmatpush1.msra.mxu0 0.0
    %1307 = vmatprep.subr.mxu0 0.0
    %1308 = vmatpush1.msra.mxu0 0.0
    %1309 = vmatprep.subr.mxu0 0.0
    %1310 = vmatpush1.msra.mxu0 0.0
    %1311 = vmatprep.subr.mxu0 0.0
    %1312 = vmatpush1.msra.mxu0 0.0
    %1313 = vmatprep.subr.mxu0 0.0
    %1314 = vmatpush1.msra.mxu0 0.0
    %1315 = vmatprep.mubr.f32.mxu0 0.0
    %v1316 = vand.u32 %v680, 4294901760
    %1317 = vmatmul.mubr.f32.gmra.mrb[0].mxu0 %v1316
    %v1318 = vpop.f32.mrb[0].mxu0
    %v1319 = vadd.f32 %v1232, %v1318
    %v1320 = vpop.f32.mrb[0].mxu0
    %1321 = vdwg.mxu0
    %v1322 = vmul.f32 %v677, 0.03125
    %v1323 = vmul.f32 %v677, %v1322
    %v1324 = vsub.f32 %v1319, %v1323
    %v1325 = vmul.f32 %v1324, 0.032258064
    %v1326 = vmax.f32 %v1325, 0.0
    %v1327 = vrsqrt.pop %v1326
    %v1328 = vmul.f32 %v1326, %v1327
    %vm1329 = vcmp.eq.f32.partialorder %v1326, inf
    %v1330 = vsel %vm1329, %v1326, %v1328
    %vm1331 = vcmp.eq.f32.partialorder %v1326, 0.0
    %v1332 = vand.u32 %v1326, 2147483648
    %v1333 = vsel %vm1331, %v1332, %v1330
    %v1334 = vadd.f32 %v1333, 1e-06
    %v1335 = vrcp.pop %v1334
    %v1336 = vmul.f32 1.0, %v1335
    %vm1337 = vcmask 31744
    %v1339 = vsel %vm1337, %v1322, 0
    %vm1341 = vcmask 1043456
    %v1343 = vsel %vm1341, %v38, 0
    %1345 = vmatprep.subr.mxu0 0.0
    %v1346 = vand.u32 %v1343, 4294901760
    %1347 = vmatpush1.msra.mxu0 %v1346
    %1348 = vmatprep.subr.mxu0 0.0
    %1349 = vmatpush1.msra.mxu0 0.0
    %1350 = vmatprep.subr.mxu0 0.0
    %1351 = vmatpush1.msra.mxu0 0.0
    %1352 = vmatprep.subr.mxu0 0.0
    %1353 = vmatpush1.msra.mxu0 0.0
    %1354 = vmatprep.subr.mxu0 0.0
    %1355 = vmatpush1.msra.mxu0 0.0
    %1356 = vmatprep.subr.mxu0 0.0
    %1357 = vmatpush1.msra.mxu0 0.0
    %1358 = vmatprep.subr.mxu0 0.0
    %1359 = vmatpush1.msra.mxu0 0.0
    %1360 = vmatprep.subr.mxu0 0.0
    %1361 = vmatpush1.msra.mxu0 0.0
    %1362 = vmatprep.subr.mxu0 0.0
    %1363 = vmatpush1.msra.mxu0 0.0
    %1364 = vmatprep.subr.mxu0 0.0
    %1365 = vmatpush1.msra.mxu0 0.0
    %1366 = vmatprep.subr.mxu0 0.0
    %1367 = vmatpush1.msra.mxu0 0.0
    %1368 = vmatprep.subr.mxu0 0.0
    %1369 = vmatpush1.msra.mxu0 0.0
    %1370 = vmatprep.subr.mxu0 0.0
    %1371 = vmatpush1.msra.mxu0 0.0
    %1372 = vmatprep.subr.mxu0 0.0
    %1373 = vmatpush1.msra.mxu0 0.0
    %1374 = vmatprep.subr.mxu0 0.0
    %1375 = vmatpush1.msra.mxu0 0.0
    %1376 = vmatprep.subr.mxu0 0.0
    %1377 = vmatpush1.msra.mxu0 0.0
    %1378 = vmatprep.subr.mxu0 0.0
    %1379 = vmatpush1.msra.mxu0 0.0
    %1380 = vmatprep.subr.mxu0 0.0
    %1381 = vmatpush1.msra.mxu0 0.0
    %1382 = vmatprep.subr.mxu0 0.0
    %1383 = vmatpush1.msra.mxu0 0.0
    %1384 = vmatprep.subr.mxu0 0.0
    %1385 = vmatpush1.msra.mxu0 0.0
    %1386 = vmatprep.subr.mxu0 0.0
    %1387 = vmatpush1.msra.mxu0 0.0
    %1388 = vmatprep.subr.mxu0 0.0
    %1389 = vmatpush1.msra.mxu0 0.0
    %1390 = vmatprep.subr.mxu0 0.0
    %1391 = vmatpush1.msra.mxu0 0.0
    %1392 = vmatprep.subr.mxu0 0.0
    %1393 = vmatpush1.msra.mxu0 0.0
    %1394 = vmatprep.subr.mxu0 0.0
    %1395 = vmatpush1.msra.mxu0 0.0
    %1396 = vmatprep.subr.mxu0 0.0
    %1397 = vmatpush1.msra.mxu0 0.0
    %1398 = vmatprep.subr.mxu0 0.0
    %1399 = vmatpush1.msra.mxu0 0.0
    %1400 = vmatprep.subr.mxu0 0.0
    %1401 = vmatpush1.msra.mxu0 0.0
    %1402 = vmatprep.subr.mxu0 0.0
    %1403 = vmatpush1.msra.mxu0 0.0
    %1404 = vmatprep.subr.mxu0 0.0
    %1405 = vmatpush1.msra.mxu0 0.0
    %1406 = vmatprep.subr.mxu0 0.0
    %1407 = vmatpush1.msra.mxu0 0.0
    %1408 = vmatprep.subr.mxu0 0.0
    %1409 = vmatpush1.msra.mxu0 0.0
    %1410 = vmatprep.mubr.f32.mxu0 0.0
    %v1411 = vand.u32 %v1339, 4294901760
    %v1412 = vsub.f32 %v1339, %v1411
    %v1413 = vand.u32 %v1412, 4294901760
    %v1414 = vsub.f32 %v1412, %v1413
    %v1415 = vand.u32 %v1414, 4294901760
    %1416 = vmatmul.mubr.f32.gmra.mrb[0].mxu0 %v1415
    %v1417 = vpop.f32.mrb[0].mxu0
    %v1418 = vadd.f32 0.0, %v1417
    %v1419 = vpop.f32.mrb[0].mxu0
    %1420 = vdwg.mxu0
    %1421 = vmatprep.subr.mxu0 0.0
    %v1422 = vand.u32 %v1343, 4294901760
    %v1423 = vsub.f32 %v1343, %v1422
    %v1424 = vand.u32 %v1423, 4294901760
    %v1425 = vsub.f32 %v1423, %v1424
    %v1426 = vand.u32 %v1425, 4294901760
    %1427 = vmatpush1.msra.mxu0 %v1426
    %1428 = vmatprep.subr.mxu0 0.0
    %1429 = vmatpush1.msra.mxu0 0.0
    %1430 = vmatprep.subr.mxu0 0.0
    %1431 = vmatpush1.msra.mxu0 0.0
    %1432 = vmatprep.subr.mxu0 0.0
    %1433 = vmatpush1.msra.mxu0 0.0
    %1434 = vmatprep.subr.mxu0 0.0
    %1435 = vmatpush1.msra.mxu0 0.0
    %1436 = vmatprep.subr.mxu0 0.0
    %1437 = vmatpush1.msra.mxu0 0.0
    %1438 = vmatprep.subr.mxu0 0.0
    %1439 = vmatpush1.msra.mxu0 0.0
    %1440 = vmatprep.subr.mxu0 0.0
    %1441 = vmatpush1.msra.mxu0 0.0
    %1442 = vmatprep.subr.mxu0 0.0
    %1443 = vmatpush1.msra.mxu0 0.0
    %1444 = vmatprep.subr.mxu0 0.0
    %1445 = vmatpush1.msra.mxu0 0.0
    %1446 = vmatprep.subr.mxu0 0.0
    %1447 = vmatpush1.msra.mxu0 0.0
    %1448 = vmatprep.subr.mxu0 0.0
    %1449 = vmatpush1.msra.mxu0 0.0
    %1450 = vmatprep.subr.mxu0 0.0
    %1451 = vmatpush1.msra.mxu0 0.0
    %1452 = vmatprep.subr.mxu0 0.0
    %1453 = vmatpush1.msra.mxu0 0.0
    %1454 = vmatprep.subr.mxu0 0.0
    %1455 = vmatpush1.msra.mxu0 0.0
    %1456 = vmatprep.subr.mxu0 0.0
    %1457 = vmatpush1.msra.mxu0 0.0
    %1458 = vmatprep.subr.mxu0 0.0
    %1459 = vmatpush1.msra.mxu0 0.0
    %1460 = vmatprep.subr.mxu0 0.0
    %1461 = vmatpush1.msra.mxu0 0.0
    %1462 = vmatprep.subr.mxu0 0.0
    %1463 = vmatpush1.msra.mxu0 0.0
    %1464 = vmatprep.subr.mxu0 0.0
    %1465 = vmatpush1.msra.mxu0 0.0
    %1466 = vmatprep.subr.mxu0 0.0
    %1467 = vmatpush1.msra.mxu0 0.0
    %1468 = vmatprep.subr.mxu0 0.0
    %1469 = vmatpush1.msra.mxu0 0.0
    %1470 = vmatprep.subr.mxu0 0.0
    %1471 = vmatpush1.msra.mxu0 0.0
    %1472 = vmatprep.subr.mxu0 0.0
    %1473 = vmatpush1.msra.mxu0 0.0
    %1474 = vmatprep.subr.mxu0 0.0
    %1475 = vmatpush1.msra.mxu0 0.0
    %1476 = vmatprep.subr.mxu0 0.0
    %1477 = vmatpush1.msra.mxu0 0.0
    %1478 = vmatprep.subr.mxu0 0.0
    %1479 = vmatpush1.msra.mxu0 0.0
    %1480 = vmatprep.subr.mxu0 0.0
    %1481 = vmatpush1.msra.mxu0 0.0
    %1482 = vmatprep.subr.mxu0 0.0
    %1483 = vmatpush1.msra.mxu0 0.0
    %1484 = vmatprep.subr.mxu0 0.0
    %1485 = vmatpush1.msra.mxu0 0.0
    %1486 = vmatprep.subr.mxu0 0.0
    %1487 = vmatpush1.msra.mxu0 0.0
    %1488 = vmatprep.subr.mxu0 0.0
    %1489 = vmatpush1.msra.mxu0 0.0
    %1490 = vmatprep.mubr.f32.mxu0 0.0
    %v1491 = vand.u32 %v1339, 4294901760
    %1492 = vmatmul.mubr.f32.gmra.mrb[0].mxu0 %v1491
    %v1493 = vpop.f32.mrb[0].mxu0
    %v1494 = vadd.f32 %v1418, %v1493
    %v1495 = vpop.f32.mrb[0].mxu0
    %1496 = vdwg.mxu0
    %1497 = vmatprep.subr.mxu0 0.0
    %v1498 = vand.u32 %v1343, 4294901760
    %v1499 = vsub.f32 %v1343, %v1498
    %1500 = vmatpush1.msra.mxu0 %v1499
    %1501 = vmatprep.subr.mxu0 0.0
    %1502 = vmatpush1.msra.mxu0 0.0
    %1503 = vmatprep.subr.mxu0 0.0
    %1504 = vmatpush1.msra.mxu0 0.0
    %1505 = vmatprep.subr.mxu0 0.0
    %1506 = vmatpush1.msra.mxu0 0.0
    %1507 = vmatprep.subr.mxu0 0.0
    %1508 = vmatpush1.msra.mxu0 0.0
    %1509 = vmatprep.subr.mxu0 0.0
    %1510 = vmatpush1.msra.mxu0 0.0
    %1511 = vmatprep.subr.mxu0 0.0
    %1512 = vmatpush1.msra.mxu0 0.0
    %1513 = vmatprep.subr.mxu0 0.0
    %1514 = vmatpush1.msra.mxu0 0.0
    %1515 = vmatprep.subr.mxu0 0.0
    %1516 = vmatpush1.msra.mxu0 0.0
    %1517 = vmatprep.subr.mxu0 0.0
    %1518 = vmatpush1.msra.mxu0 0.0
    %1519 = vmatprep.subr.mxu0 0.0
    %1520 = vmatpush1.msra.mxu0 0.0
    %1521 = vmatprep.subr.mxu0 0.0
    %1522 = vmatpush1.msra.mxu0 0.0
    %1523 = vmatprep.subr.mxu0 0.0
    %1524 = vmatpush1.msra.mxu0 0.0
    %1525 = vmatprep.subr.mxu0 0.0
    %1526 = vmatpush1.msra.mxu0 0.0
    %1527 = vmatprep.subr.mxu0 0.0
    %1528 = vmatpush1.msra.mxu0 0.0
    %1529 = vmatprep.subr.mxu0 0.0
    %1530 = vmatpush1.msra.mxu0 0.0
    %1531 = vmatprep.subr.mxu0 0.0
    %1532 = vmatpush1.msra.mxu0 0.0
    %1533 = vmatprep.subr.mxu0 0.0
    %1534 = vmatpush1.msra.mxu0 0.0
    %1535 = vmatprep.subr.mxu0 0.0
    %1536 = vmatpush1.msra.mxu0 0.0
    %1537 = vmatprep.subr.mxu0 0.0
    %1538 = vmatpush1.msra.mxu0 0.0
    %1539 = vmatprep.subr.mxu0 0.0
    %1540 = vmatpush1.msra.mxu0 0.0
    %1541 = vmatprep.subr.mxu0 0.0
    %1542 = vmatpush1.msra.mxu0 0.0
    %1543 = vmatprep.subr.mxu0 0.0
    %1544 = vmatpush1.msra.mxu0 0.0
    %1545 = vmatprep.subr.mxu0 0.0
    %1546 = vmatpush1.msra.mxu0 0.0
    %1547 = vmatprep.subr.mxu0 0.0
    %1548 = vmatpush1.msra.mxu0 0.0
    %1549 = vmatprep.subr.mxu0 0.0
    %1550 = vmatpush1.msra.mxu0 0.0
    %1551 = vmatprep.subr.mxu0 0.0
    %1552 = vmatpush1.msra.mxu0 0.0
    %1553 = vmatprep.subr.mxu0 0.0
    %1554 = vmatpush1.msra.mxu0 0.0
    %1555 = vmatprep.subr.mxu0 0.0
    %1556 = vmatpush1.msra.mxu0 0.0
    %1557 = vmatprep.subr.mxu0 0.0
    %1558 = vmatpush1.msra.mxu0 0.0
    %1559 = vmatprep.subr.mxu0 0.0
    %1560 = vmatpush1.msra.mxu0 0.0
    %1561 = vmatprep.subr.mxu0 0.0
    %1562 = vmatpush1.msra.mxu0 0.0
    %1563 = vmatprep.mubr.f32.mxu0 0.0
    %v1564 = vand.u32 %v1339, 4294901760
    %v1565 = vsub.f32 %v1339, %v1564
    %1566 = vmatmul.mubr.f32.gmra.mrb[0].mxu0 %v1565
    %v1567 = vpop.f32.mrb[0].mxu0
    %v1568 = vadd.f32 %v1494, %v1567
    %v1569 = vpop.f32.mrb[0].mxu0
    %1570 = vdwg.mxu0
    %1571 = vmatprep.subr.mxu0 0.0
    %v1572 = vand.u32 %v1343, 4294901760
    %1573 = vmatpush1.msra.mxu0 %v1572
    %1574 = vmatprep.subr.mxu0 0.0
    %1575 = vmatpush1.msra.mxu0 0.0
    %1576 = vmatprep.subr.mxu0 0.0
    %1577 = vmatpush1.msra.mxu0 0.0
    %1578 = vmatprep.subr.mxu0 0.0
    %1579 = vmatpush1.msra.mxu0 0.0
    %1580 = vmatprep.subr.mxu0 0.0
    %1581 = vmatpush1.msra.mxu0 0.0
    %1582 = vmatprep.subr.mxu0 0.0
    %1583 = vmatpush1.msra.mxu0 0.0
    %1584 = vmatprep.subr.mxu0 0.0
    %1585 = vmatpush1.msra.mxu0 0.0
    %1586 = vmatprep.subr.mxu0 0.0
    %1587 = vmatpush1.msra.mxu0 0.0
    %1588 = vmatprep.subr.mxu0 0.0
    %1589 = vmatpush1.msra.mxu0 0.0
    %1590 = vmatprep.subr.mxu0 0.0
    %1591 = vmatpush1.msra.mxu0 0.0
    %1592 = vmatprep.subr.mxu0 0.0
    %1593 = vmatpush1.msra.mxu0 0.0
    %1594 = vmatprep.subr.mxu0 0.0
    %1595 = vmatpush1.msra.mxu0 0.0
    %1596 = vmatprep.subr.mxu0 0.0
    %1597 = vmatpush1.msra.mxu0 0.0
    %1598 = vmatprep.subr.mxu0 0.0
    %1599 = vmatpush1.msra.mxu0 0.0
    %1600 = vmatprep.subr.mxu0 0.0
    %1601 = vmatpush1.msra.mxu0 0.0
    %1602 = vmatprep.subr.mxu0 0.0
    %1603 = vmatpush1.msra.mxu0 0.0
    %1604 = vmatprep.subr.mxu0 0.0
    %1605 = vmatpush1.msra.mxu0 0.0
    %1606 = vmatprep.subr.mxu0 0.0
    %1607 = vmatpush1.msra.mxu0 0.0
    %1608 = vmatprep.subr.mxu0 0.0
    %1609 = vmatpush1.msra.mxu0 0.0
    %1610 = vmatprep.subr.mxu0 0.0
    %1611 = vmatpush1.msra.mxu0 0.0
    %1612 = vmatprep.subr.mxu0 0.0
    %1613 = vmatpush1.msra.mxu0 0.0
    %1614 = vmatprep.subr.mxu0 0.0
    %1615 = vmatpush1.msra.mxu0 0.0
    %1616 = vmatprep.subr.mxu0 0.0
    %1617 = vmatpush1.msra.mxu0 0.0
    %1618 = vmatprep.subr.mxu0 0.0
    %1619 = vmatpush1.msra.mxu0 0.0
    %1620 = vmatprep.subr.mxu0 0.0
    %1621 = vmatpush1.msra.mxu0 0.0
    %1622 = vmatprep.subr.mxu0 0.0
    %1623 = vmatpush1.msra.mxu0 0.0
    %1624 = vmatprep.subr.mxu0 0.0
    %1625 = vmatpush1.msra.mxu0 0.0
    %1626 = vmatprep.subr.mxu0 0.0
    %1627 = vmatpush1.msra.mxu0 0.0
    %1628 = vmatprep.subr.mxu0 0.0
    %1629 = vmatpush1.msra.mxu0 0.0
    %1630 = vmatprep.subr.mxu0 0.0
    %1631 = vmatpush1.msra.mxu0 0.0
    %1632 = vmatprep.subr.mxu0 0.0
    %1633 = vmatpush1.msra.mxu0 0.0
    %1634 = vmatprep.subr.mxu0 0.0
    %1635 = vmatpush1.msra.mxu0 0.0
    %1636 = vmatprep.mubr.f32.mxu0 0.0
    %v1637 = vand.u32 %v1339, 4294901760
    %v1638 = vsub.f32 %v1339, %v1637
    %v1639 = vand.u32 %v1638, 4294901760
    %1640 = vmatmul.mubr.f32.gmra.mrb[0].mxu0 %v1639
    %v1641 = vpop.f32.mrb[0].mxu0
    %v1642 = vadd.f32 %v1568, %v1641
    %v1643 = vpop.f32.mrb[0].mxu0
    %1644 = vdwg.mxu0
    %1645 = vmatprep.subr.mxu0 0.0
    %v1646 = vand.u32 %v1343, 4294901760
    %v1647 = vsub.f32 %v1343, %v1646
    %v1648 = vand.u32 %v1647, 4294901760
    %1649 = vmatpush1.msra.mxu0 %v1648
    %1650 = vmatprep.subr.mxu0 0.0
    %1651 = vmatpush1.msra.mxu0 0.0
    %1652 = vmatprep.subr.mxu0 0.0
    %1653 = vmatpush1.msra.mxu0 0.0
    %1654 = vmatprep.subr.mxu0 0.0
    %1655 = vmatpush1.msra.mxu0 0.0
    %1656 = vmatprep.subr.mxu0 0.0
    %1657 = vmatpush1.msra.mxu0 0.0
    %1658 = vmatprep.subr.mxu0 0.0
    %1659 = vmatpush1.msra.mxu0 0.0
    %1660 = vmatprep.subr.mxu0 0.0
    %1661 = vmatpush1.msra.mxu0 0.0
    %1662 = vmatprep.subr.mxu0 0.0
    %1663 = vmatpush1.msra.mxu0 0.0
    %1664 = vmatprep.subr.mxu0 0.0
    %1665 = vmatpush1.msra.mxu0 0.0
    %1666 = vmatprep.subr.mxu0 0.0
    %1667 = vmatpush1.msra.mxu0 0.0
    %1668 = vmatprep.subr.mxu0 0.0
    %1669 = vmatpush1.msra.mxu0 0.0
    %1670 = vmatprep.subr.mxu0 0.0
    %1671 = vmatpush1.msra.mxu0 0.0
    %1672 = vmatprep.subr.mxu0 0.0
    %1673 = vmatpush1.msra.mxu0 0.0
    %1674 = vmatprep.subr.mxu0 0.0
    %1675 = vmatpush1.msra.mxu0 0.0
    %1676 = vmatprep.subr.mxu0 0.0
    %1677 = vmatpush1.msra.mxu0 0.0
    %1678 = vmatprep.subr.mxu0 0.0
    %1679 = vmatpush1.msra.mxu0 0.0
    %1680 = vmatprep.subr.mxu0 0.0
    %1681 = vmatpush1.msra.mxu0 0.0
    %1682 = vmatprep.subr.mxu0 0.0
    %1683 = vmatpush1.msra.mxu0 0.0
    %1684 = vmatprep.subr.mxu0 0.0
    %1685 = vmatpush1.msra.mxu0 0.0
    %1686 = vmatprep.subr.mxu0 0.0
    %1687 = vmatpush1.msra.mxu0 0.0
    %1688 = vmatprep.subr.mxu0 0.0
    %1689 = vmatpush1.msra.mxu0 0.0
    %1690 = vmatprep.subr.mxu0 0.0
    %1691 = vmatpush1.msra.mxu0 0.0
    %1692 = vmatprep.subr.mxu0 0.0
    %1693 = vmatpush1.msra.mxu0 0.0
    %1694 = vmatprep.subr.mxu0 0.0
    %1695 = vmatpush1.msra.mxu0 0.0
    %1696 = vmatprep.subr.mxu0 0.0
    %1697 = vmatpush1.msra.mxu0 0.0
    %1698 = vmatprep.subr.mxu0 0.0
    %1699 = vmatpush1.msra.mxu0 0.0
    %1700 = vmatprep.subr.mxu0 0.0
    %1701 = vmatpush1.msra.mxu0 0.0
    %1702 = vmatprep.subr.mxu0 0.0
    %1703 = vmatpush1.msra.mxu0 0.0
    %1704 = vmatprep.subr.mxu0 0.0
    %1705 = vmatpush1.msra.mxu0 0.0
    %1706 = vmatprep.subr.mxu0 0.0
    %1707 = vmatpush1.msra.mxu0 0.0
    %1708 = vmatprep.subr.mxu0 0.0
    %1709 = vmatpush1.msra.mxu0 0.0
    %1710 = vmatprep.subr.mxu0 0.0
    %1711 = vmatpush1.msra.mxu0 0.0
    %1712 = vmatprep.mubr.f32.mxu0 0.0
    %v1713 = vand.u32 %v1339, 4294901760
    %1714 = vmatmul.mubr.f32.gmra.mrb[0].mxu0 %v1713
    %v1715 = vpop.f32.mrb[0].mxu0
    %v1716 = vadd.f32 %v1642, %v1715
    %v1717 = vpop.f32.mrb[0].mxu0
    %1718 = vdwg.mxu0
    %1719 = vmatprep.subr.mxu0 0.0
    %v1720 = vand.u32 %v1343, 4294901760
    %1721 = vmatpush1.msra.mxu0 %v1720
    %1722 = vmatprep.subr.mxu0 0.0
    %1723 = vmatpush1.msra.mxu0 0.0
    %1724 = vmatprep.subr.mxu0 0.0
    %1725 = vmatpush1.msra.mxu0 0.0
    %1726 = vmatprep.subr.mxu0 0.0
    %1727 = vmatpush1.msra.mxu0 0.0
    %1728 = vmatprep.subr.mxu0 0.0
    %1729 = vmatpush1.msra.mxu0 0.0
    %1730 = vmatprep.subr.mxu0 0.0
    %1731 = vmatpush1.msra.mxu0 0.0
    %1732 = vmatprep.subr.mxu0 0.0
    %1733 = vmatpush1.msra.mxu0 0.0
    %1734 = vmatprep.subr.mxu0 0.0
    %1735 = vmatpush1.msra.mxu0 0.0
    %1736 = vmatprep.subr.mxu0 0.0
    %1737 = vmatpush1.msra.mxu0 0.0
    %1738 = vmatprep.subr.mxu0 0.0
    %1739 = vmatpush1.msra.mxu0 0.0
    %1740 = vmatprep.subr.mxu0 0.0
    %1741 = vmatpush1.msra.mxu0 0.0
    %1742 = vmatprep.subr.mxu0 0.0
    %1743 = vmatpush1.msra.mxu0 0.0
    %1744 = vmatprep.subr.mxu0 0.0
    %1745 = vmatpush1.msra.mxu0 0.0
    %1746 = vmatprep.subr.mxu0 0.0
    %1747 = vmatpush1.msra.mxu0 0.0
    %1748 = vmatprep.subr.mxu0 0.0
    %1749 = vmatpush1.msra.mxu0 0.0
    %1750 = vmatprep.subr.mxu0 0.0
    %1751 = vmatpush1.msra.mxu0 0.0
    %1752 = vmatprep.subr.mxu0 0.0
    %1753 = vmatpush1.msra.mxu0 0.0
    %1754 = vmatprep.subr.mxu0 0.0
    %1755 = vmatpush1.msra.mxu0 0.0
    %1756 = vmatprep.subr.mxu0 0.0
    %1757 = vmatpush1.msra.mxu0 0.0
    %1758 = vmatprep.subr.mxu0 0.0
    %1759 = vmatpush1.msra.mxu0 0.0
    %1760 = vmatprep.subr.mxu0 0.0
    %1761 = vmatpush1.msra.mxu0 0.0
    %1762 = vmatprep.subr.mxu0 0.0
    %1763 = vmatpush1.msra.mxu0 0.0
    %1764 = vmatprep.subr.mxu0 0.0
    %1765 = vmatpush1.msra.mxu0 0.0
    %1766 = vmatprep.subr.mxu0 0.0
    %1767 = vmatpush1.msra.mxu0 0.0
    %1768 = vmatprep.subr.mxu0 0.0
    %1769 = vmatpush1.msra.mxu0 0.0
    %1770 = vmatprep.subr.mxu0 0.0
    %1771 = vmatpush1.msra.mxu0 0.0
    %1772 = vmatprep.subr.mxu0 0.0
    %1773 = vmatpush1.msra.mxu0 0.0
    %1774 = vmatprep.subr.mxu0 0.0
    %1775 = vmatpush1.msra.mxu0 0.0
    %1776 = vmatprep.subr.mxu0 0.0
    %1777 = vmatpush1.msra.mxu0 0.0
    %1778 = vmatprep.subr.mxu0 0.0
    %1779 = vmatpush1.msra.mxu0 0.0
    %1780 = vmatprep.subr.mxu0 0.0
    %1781 = vmatpush1.msra.mxu0 0.0
    %1782 = vmatprep.subr.mxu0 0.0
    %1783 = vmatpush1.msra.mxu0 0.0
    %1784 = vmatprep.mubr.f32.mxu0 0.0
    %v1785 = vand.u32 %v1339, 4294901760
    %1786 = vmatmul.mubr.f32.gmra.mrb[0].mxu0 %v1785
    %v1787 = vpop.f32.mrb[0].mxu0
    %v1788 = vadd.f32 %v1716, %v1787
    %v1789 = vpop.f32.mrb[0].mxu0
    %1790 = vdwg.mxu0
    %v1792 = vsel %vm1337, %v1336, 0
    %1794 = vmatprep.subr.mxu0 0.0
    %v1795 = vand.u32 %v1343, 4294901760
    %1796 = vmatpush1.msra.mxu0 %v1795
    %1797 = vmatprep.subr.mxu0 0.0
    %1798 = vmatpush1.msra.mxu0 0.0
    %1799 = vmatprep.subr.mxu0 0.0
    %1800 = vmatpush1.msra.mxu0 0.0
    %1801 = vmatprep.subr.mxu0 0.0
    %1802 = vmatpush1.msra.mxu0 0.0
    %1803 = vmatprep.subr.mxu0 0.0
    %1804 = vmatpush1.msra.mxu0 0.0
    %1805 = vmatprep.subr.mxu0 0.0
    %1806 = vmatpush1.msra.mxu0 0.0
    %1807 = vmatprep.subr.mxu0 0.0
    %1808 = vmatpush1.msra.mxu0 0.0
    %1809 = vmatprep.subr.mxu0 0.0
    %1810 = vmatpush1.msra.mxu0 0.0
    %1811 = vmatprep.subr.mxu0 0.0
    %1812 = vmatpush1.msra.mxu0 0.0
    %1813 = vmatprep.subr.mxu0 0.0
    %1814 = vmatpush1.msra.mxu0 0.0
    %1815 = vmatprep.subr.mxu0 0.0
    %1816 = vmatpush1.msra.mxu0 0.0
    %1817 = vmatprep.subr.mxu0 0.0
    %1818 = vmatpush1.msra.mxu0 0.0
    %1819 = vmatprep.subr.mxu0 0.0
    %1820 = vmatpush1.msra.mxu0 0.0
    %1821 = vmatprep.subr.mxu0 0.0
    %1822 = vmatpush1.msra.mxu0 0.0
    %1823 = vmatprep.subr.mxu0 0.0
    %1824 = vmatpush1.msra.mxu0 0.0
    %1825 = vmatprep.subr.mxu0 0.0
    %1826 = vmatpush1.msra.mxu0 0.0
    %1827 = vmatprep.subr.mxu0 0.0
    %1828 = vmatpush1.msra.mxu0 0.0
    %1829 = vmatprep.subr.mxu0 0.0
    %1830 = vmatpush1.msra.mxu0 0.0
    %1831 = vmatprep.subr.mxu0 0.0
    %1832 = vmatpush1.msra.mxu0 0.0
    %1833 = vmatprep.subr.mxu0 0.0
    %1834 = vmatpush1.msra.mxu0 0.0
    %1835 = vmatprep.subr.mxu0 0.0
    %1836 = vmatpush1.msra.mxu0 0.0
    %1837 = vmatprep.subr.mxu0 0.0
    %1838 = vmatpush1.msra.mxu0 0.0
    %1839 = vmatprep.subr.mxu0 0.0
    %1840 = vmatpush1.msra.mxu0 0.0
    %1841 = vmatprep.subr.mxu0 0.0
    %1842 = vmatpush1.msra.mxu0 0.0
    %1843 = vmatprep.subr.mxu0 0.0
    %1844 = vmatpush1.msra.mxu0 0.0
    %1845 = vmatprep.subr.mxu0 0.0
    %1846 = vmatpush1.msra.mxu0 0.0
    %1847 = vmatprep.subr.mxu0 0.0
    %1848 = vmatpush1.msra.mxu0 0.0
    %1849 = vmatprep.subr.mxu0 0.0
    %1850 = vmatpush1.msra.mxu0 0.0
    %1851 = vmatprep.subr.mxu0 0.0
    %1852 = vmatpush1.msra.mxu0 0.0
    %1853 = vmatprep.subr.mxu0 0.0
    %1854 = vmatpush1.msra.mxu0 0.0
    %1855 = vmatprep.subr.mxu0 0.0
    %1856 = vmatpush1.msra.mxu0 0.0
    %1857 = vmatprep.subr.mxu0 0.0
    %1858 = vmatpush1.msra.mxu0 0.0
    %1859 = vmatprep.mubr.f32.mxu0 0.0
    %v1860 = vand.u32 %v1792, 4294901760
    %v1861 = vsub.f32 %v1792, %v1860
    %v1862 = vand.u32 %v1861, 4294901760
    %v1863 = vsub.f32 %v1861, %v1862
    %v1864 = vand.u32 %v1863, 4294901760
    %1865 = vmatmul.mubr.f32.gmra.mrb[0].mxu0 %v1864
    %v1866 = vpop.f32.mrb[0].mxu0
    %v1867 = vadd.f32 0.0, %v1866
    %v1868 = vpop.f32.mrb[0].mxu0
    %1869 = vdwg.mxu0
    %1870 = vmatprep.subr.mxu0 0.0
    %v1871 = vand.u32 %v1343, 4294901760
    %v1872 = vsub.f32 %v1343, %v1871
    %v1873 = vand.u32 %v1872, 4294901760
    %v1874 = vsub.f32 %v1872, %v1873
    %v1875 = vand.u32 %v1874, 4294901760
    %1876 = vmatpush1.msra.mxu0 %v1875
    %1877 = vmatprep.subr.mxu0 0.0
    %1878 = vmatpush1.msra.mxu0 0.0
    %1879 = vmatprep.subr.mxu0 0.0
    %1880 = vmatpush1.msra.mxu0 0.0
    %1881 = vmatprep.subr.mxu0 0.0
    %1882 = vmatpush1.msra.mxu0 0.0
    %1883 = vmatprep.subr.mxu0 0.0
    %1884 = vmatpush1.msra.mxu0 0.0
    %1885 = vmatprep.subr.mxu0 0.0
    %1886 = vmatpush1.msra.mxu0 0.0
    %1887 = vmatprep.subr.mxu0 0.0
    %1888 = vmatpush1.msra.mxu0 0.0
    %1889 = vmatprep.subr.mxu0 0.0
    %1890 = vmatpush1.msra.mxu0 0.0
    %1891 = vmatprep.subr.mxu0 0.0
    %1892 = vmatpush1.msra.mxu0 0.0
    %1893 = vmatprep.subr.mxu0 0.0
    %1894 = vmatpush1.msra.mxu0 0.0
    %1895 = vmatprep.subr.mxu0 0.0
    %1896 = vmatpush1.msra.mxu0 0.0
    %1897 = vmatprep.subr.mxu0 0.0
    %1898 = vmatpush1.msra.mxu0 0.0
    %1899 = vmatprep.subr.mxu0 0.0
    %1900 = vmatpush1.msra.mxu0 0.0
    %1901 = vmatprep.subr.mxu0 0.0
    %1902 = vmatpush1.msra.mxu0 0.0
    %1903 = vmatprep.subr.mxu0 0.0
    %1904 = vmatpush1.msra.mxu0 0.0
    %1905 = vmatprep.subr.mxu0 0.0
    %1906 = vmatpush1.msra.mxu0 0.0
    %1907 = vmatprep.subr.mxu0 0.0
    %1908 = vmatpush1.msra.mxu0 0.0
    %1909 = vmatprep.subr.mxu0 0.0
    %1910 = vmatpush1.msra.mxu0 0.0
    %1911 = vmatprep.subr.mxu0 0.0
    %1912 = vmatpush1.msra.mxu0 0.0
    %1913 = vmatprep.subr.mxu0 0.0
    %1914 = vmatpush1.msra.mxu0 0.0
    %1915 = vmatprep.subr.mxu0 0.0
    %1916 = vmatpush1.msra.mxu0 0.0
    %1917 = vmatprep.subr.mxu0 0.0
    %1918 = vmatpush1.msra.mxu0 0.0
    %1919 = vmatprep.subr.mxu0 0.0
    %1920 = vmatpush1.msra.mxu0 0.0
    %1921 = vmatprep.subr.mxu0 0.0
    %1922 = vmatpush1.msra.mxu0 0.0
    %1923 = vmatprep.subr.mxu0 0.0
    %1924 = vmatpush1.msra.mxu0 0.0
    %1925 = vmatprep.subr.mxu0 0.0
    %1926 = vmatpush1.msra.mxu0 0.0
    %1927 = vmatprep.subr.mxu0 0.0
    %1928 = vmatpush1.msra.mxu0 0.0
    %1929 = vmatprep.subr.mxu0 0.0
    %1930 = vmatpush1.msra.mxu0 0.0
    %1931 = vmatprep.subr.mxu0 0.0
    %1932 = vmatpush1.msra.mxu0 0.0
    %1933 = vmatprep.subr.mxu0 0.0
    %1934 = vmatpush1.msra.mxu0 0.0
    %1935 = vmatprep.subr.mxu0 0.0
    %1936 = vmatpush1.msra.mxu0 0.0
    %1937 = vmatprep.subr.mxu0 0.0
    %1938 = vmatpush1.msra.mxu0 0.0
    %1939 = vmatprep.mubr.f32.mxu0 0.0
    %v1940 = vand.u32 %v1792, 4294901760
    %1941 = vmatmul.mubr.f32.gmra.mrb[0].mxu0 %v1940
    %v1942 = vpop.f32.mrb[0].mxu0
    %v1943 = vadd.f32 %v1867, %v1942
    %v1944 = vpop.f32.mrb[0].mxu0
    %1945 = vdwg.mxu0
    %1946 = vmatprep.subr.mxu0 0.0
    %v1947 = vand.u32 %v1343, 4294901760
    %v1948 = vsub.f32 %v1343, %v1947
    %1949 = vmatpush1.msra.mxu0 %v1948
    %1950 = vmatprep.subr.mxu0 0.0
    %1951 = vmatpush1.msra.mxu0 0.0
    %1952 = vmatprep.subr.mxu0 0.0
    %1953 = vmatpush1.msra.mxu0 0.0
    %1954 = vmatprep.subr.mxu0 0.0
    %1955 = vmatpush1.msra.mxu0 0.0
    %1956 = vmatprep.subr.mxu0 0.0
    %1957 = vmatpush1.msra.mxu0 0.0
    %1958 = vmatprep.subr.mxu0 0.0
    %1959 = vmatpush1.msra.mxu0 0.0
    %1960 = vmatprep.subr.mxu0 0.0
    %1961 = vmatpush1.msra.mxu0 0.0
    %1962 = vmatprep.subr.mxu0 0.0
    %1963 = vmatpush1.msra.mxu0 0.0
    %1964 = vmatprep.subr.mxu0 0.0
    %1965 = vmatpush1.msra.mxu0 0.0
    %1966 = vmatprep.subr.mxu0 0.0
    %1967 = vmatpush1.msra.mxu0 0.0
    %1968 = vmatprep.subr.mxu0 0.0
    %1969 = vmatpush1.msra.mxu0 0.0
    %1970 = vmatprep.subr.mxu0 0.0
    %1971 = vmatpush1.msra.mxu0 0.0
    %1972 = vmatprep.subr.mxu0 0.0
    %1973 = vmatpush1.msra.mxu0 0.0
    %1974 = vmatprep.subr.mxu0 0.0
    %1975 = vmatpush1.msra.mxu0 0.0
    %1976 = vmatprep.subr.mxu0 0.0
    %1977 = vmatpush1.msra.mxu0 0.0
    %1978 = vmatprep.subr.mxu0 0.0
    %1979 = vmatpush1.msra.mxu0 0.0
    %1980 = vmatprep.subr.mxu0 0.0
    %1981 = vmatpush1.msra.mxu0 0.0
    %1982 = vmatprep.subr.mxu0 0.0
    %1983 = vmatpush1.msra.mxu0 0.0
    %1984 = vmatprep.subr.mxu0 0.0
    %1985 = vmatpush1.msra.mxu0 0.0
    %1986 = vmatprep.subr.mxu0 0.0
    %1987 = vmatpush1.msra.mxu0 0.0
    %1988 = vmatprep.subr.mxu0 0.0
    %1989 = vmatpush1.msra.mxu0 0.0
    %1990 = vmatprep.subr.mxu0 0.0
    %1991 = vmatpush1.msra.mxu0 0.0
    %1992 = vmatprep.subr.mxu0 0.0
    %1993 = vmatpush1.msra.mxu0 0.0
    %1994 = vmatprep.subr.mxu0 0.0
    %1995 = vmatpush1.msra.mxu0 0.0
    %1996 = vmatprep.subr.mxu0 0.0
    %1997 = vmatpush1.msra.mxu0 0.0
    %1998 = vmatprep.subr.mxu0 0.0
    %1999 = vmatpush1.msra.mxu0 0.0
    %2000 = vmatprep.subr.mxu0 0.0
    %2001 = vmatpush1.msra.mxu0 0.0
    %2002 = vmatprep.subr.mxu0 0.0
    %2003 = vmatpush1.msra.mxu0 0.0
    %2004 = vmatprep.subr.mxu0 0.0
    %2005 = vmatpush1.msra.mxu0 0.0
    %2006 = vmatprep.subr.mxu0 0.0
    %2007 = vmatpush1.msra.mxu0 0.0
    %2008 = vmatprep.subr.mxu0 0.0
    %2009 = vmatpush1.msra.mxu0 0.0
    %2010 = vmatprep.subr.mxu0 0.0
    %2011 = vmatpush1.msra.mxu0 0.0
    %2012 = vmatprep.mubr.f32.mxu0 0.0
    %v2013 = vand.u32 %v1792, 4294901760
    %v2014 = vsub.f32 %v1792, %v2013
    %2015 = vmatmul.mubr.f32.gmra.mrb[0].mxu0 %v2014
    %v2016 = vpop.f32.mrb[0].mxu0
    %v2017 = vadd.f32 %v1943, %v2016
    %v2018 = vpop.f32.mrb[0].mxu0
    %2019 = vdwg.mxu0
    %2020 = vmatprep.subr.mxu0 0.0
    %v2021 = vand.u32 %v1343, 4294901760
    %2022 = vmatpush1.msra.mxu0 %v2021
    %2023 = vmatprep.subr.mxu0 0.0
    %2024 = vmatpush1.msra.mxu0 0.0
    %2025 = vmatprep.subr.mxu0 0.0
    %2026 = vmatpush1.msra.mxu0 0.0
    %2027 = vmatprep.subr.mxu0 0.0
    %2028 = vmatpush1.msra.mxu0 0.0
    %2029 = vmatprep.subr.mxu0 0.0
    %2030 = vmatpush1.msra.mxu0 0.0
    %2031 = vmatprep.subr.mxu0 0.0
    %2032 = vmatpush1.msra.mxu0 0.0
    %2033 = vmatprep.subr.mxu0 0.0
    %2034 = vmatpush1.msra.mxu0 0.0
    %2035 = vmatprep.subr.mxu0 0.0
    %2036 = vmatpush1.msra.mxu0 0.0
    %2037 = vmatprep.subr.mxu0 0.0
    %2038 = vmatpush1.msra.mxu0 0.0
    %2039 = vmatprep.subr.mxu0 0.0
    %2040 = vmatpush1.msra.mxu0 0.0
    %2041 = vmatprep.subr.mxu0 0.0
    %2042 = vmatpush1.msra.mxu0 0.0
    %2043 = vmatprep.subr.mxu0 0.0
    %2044 = vmatpush1.msra.mxu0 0.0
    %2045 = vmatprep.subr.mxu0 0.0
    %2046 = vmatpush1.msra.mxu0 0.0
    %2047 = vmatprep.subr.mxu0 0.0
    %2048 = vmatpush1.msra.mxu0 0.0
    %2049 = vmatprep.subr.mxu0 0.0
    %2050 = vmatpush1.msra.mxu0 0.0
    %2051 = vmatprep.subr.mxu0 0.0
    %2052 = vmatpush1.msra.mxu0 0.0
    %2053 = vmatprep.subr.mxu0 0.0
    %2054 = vmatpush1.msra.mxu0 0.0
    %2055 = vmatprep.subr.mxu0 0.0
    %2056 = vmatpush1.msra.mxu0 0.0
    %2057 = vmatprep.subr.mxu0 0.0
    %2058 = vmatpush1.msra.mxu0 0.0
    %2059 = vmatprep.subr.mxu0 0.0
    %2060 = vmatpush1.msra.mxu0 0.0
    %2061 = vmatprep.subr.mxu0 0.0
    %2062 = vmatpush1.msra.mxu0 0.0
    %2063 = vmatprep.subr.mxu0 0.0
    %2064 = vmatpush1.msra.mxu0 0.0
    %2065 = vmatprep.subr.mxu0 0.0
    %2066 = vmatpush1.msra.mxu0 0.0
    %2067 = vmatprep.subr.mxu0 0.0
    %2068 = vmatpush1.msra.mxu0 0.0
    %2069 = vmatprep.subr.mxu0 0.0
    %2070 = vmatpush1.msra.mxu0 0.0
    %2071 = vmatprep.subr.mxu0 0.0
    %2072 = vmatpush1.msra.mxu0 0.0
    %2073 = vmatprep.subr.mxu0 0.0
    %2074 = vmatpush1.msra.mxu0 0.0
    %2075 = vmatprep.subr.mxu0 0.0
    %2076 = vmatpush1.msra.mxu0 0.0
    %2077 = vmatprep.subr.mxu0 0.0
    %2078 = vmatpush1.msra.mxu0 0.0
    %2079 = vmatprep.subr.mxu0 0.0
    %2080 = vmatpush1.msra.mxu0 0.0
    %2081 = vmatprep.subr.mxu0 0.0
    %2082 = vmatpush1.msra.mxu0 0.0
    %2083 = vmatprep.subr.mxu0 0.0
    %2084 = vmatpush1.msra.mxu0 0.0
    %2085 = vmatprep.mubr.f32.mxu0 0.0
    %v2086 = vand.u32 %v1792, 4294901760
    %v2087 = vsub.f32 %v1792, %v2086
    %v2088 = vand.u32 %v2087, 4294901760
    %2089 = vmatmul.mubr.f32.gmra.mrb[0].mxu0 %v2088
    %v2090 = vpop.f32.mrb[0].mxu0
    %v2091 = vadd.f32 %v2017, %v2090
    %v2092 = vpop.f32.mrb[0].mxu0
    %2093 = vdwg.mxu0
    %2094 = vmatprep.subr.mxu0 0.0
    %v2095 = vand.u32 %v1343, 4294901760
    %v2096 = vsub.f32 %v1343, %v2095
    %v2097 = vand.u32 %v2096, 4294901760
    %2098 = vmatpush1.msra.mxu0 %v2097
    %2099 = vmatprep.subr.mxu0 0.0
    %2100 = vmatpush1.msra.mxu0 0.0
    %2101 = vmatprep.subr.mxu0 0.0
    %2102 = vmatpush1.msra.mxu0 0.0
    %2103 = vmatprep.subr.mxu0 0.0
    %2104 = vmatpush1.msra.mxu0 0.0
    %2105 = vmatprep.subr.mxu0 0.0
    %2106 = vmatpush1.msra.mxu0 0.0
    %2107 = vmatprep.subr.mxu0 0.0
    %2108 = vmatpush1.msra.mxu0 0.0
    %2109 = vmatprep.subr.mxu0 0.0
    %2110 = vmatpush1.msra.mxu0 0.0
    %2111 = vmatprep.subr.mxu0 0.0
    %2112 = vmatpush1.msra.mxu0 0.0
    %2113 = vmatprep.subr.mxu0 0.0
    %2114 = vmatpush1.msra.mxu0 0.0
    %2115 = vmatprep.subr.mxu0 0.0
    %2116 = vmatpush1.msra.mxu0 0.0
    %2117 = vmatprep.subr.mxu0 0.0
    %2118 = vmatpush1.msra.mxu0 0.0
    %2119 = vmatprep.subr.mxu0 0.0
    %2120 = vmatpush1.msra.mxu0 0.0
    %2121 = vmatprep.subr.mxu0 0.0
    %2122 = vmatpush1.msra.mxu0 0.0
    %2123 = vmatprep.subr.mxu0 0.0
    %2124 = vmatpush1.msra.mxu0 0.0
    %2125 = vmatprep.subr.mxu0 0.0
    %2126 = vmatpush1.msra.mxu0 0.0
    %2127 = vmatprep.subr.mxu0 0.0
    %2128 = vmatpush1.msra.mxu0 0.0
    %2129 = vmatprep.subr.mxu0 0.0
    %2130 = vmatpush1.msra.mxu0 0.0
    %2131 = vmatprep.subr.mxu0 0.0
    %2132 = vmatpush1.msra.mxu0 0.0
    %2133 = vmatprep.subr.mxu0 0.0
    %2134 = vmatpush1.msra.mxu0 0.0
    %2135 = vmatprep.subr.mxu0 0.0
    %2136 = vmatpush1.msra.mxu0 0.0
    %2137 = vmatprep.subr.mxu0 0.0
    %2138 = vmatpush1.msra.mxu0 0.0
    %2139 = vmatprep.subr.mxu0 0.0
    %2140 = vmatpush1.msra.mxu0 0.0
    %2141 = vmatprep.subr.mxu0 0.0
    %2142 = vmatpush1.msra.mxu0 0.0
    %2143 = vmatprep.subr.mxu0 0.0
    %2144 = vmatpush1.msra.mxu0 0.0
    %2145 = vmatprep.subr.mxu0 0.0
    %2146 = vmatpush1.msra.mxu0 0.0
    %2147 = vmatprep.subr.mxu0 0.0
    %2148 = vmatpush1.msra.mxu0 0.0
    %2149 = vmatprep.subr.mxu0 0.0
    %2150 = vmatpush1.msra.mxu0 0.0
    %2151 = vmatprep.subr.mxu0 0.0
    %2152 = vmatpush1.msra.mxu0 0.0
    %2153 = vmatprep.subr.mxu0 0.0
    %2154 = vmatpush1.msra.mxu0 0.0
    %2155 = vmatprep.subr.mxu0 0.0
    %2156 = vmatpush1.msra.mxu0 0.0
    %2157 = vmatprep.subr.mxu0 0.0
    %2158 = vmatpush1.msra.mxu0 0.0
    %2159 = vmatprep.subr.mxu0 0.0
    %2160 = vmatpush1.msra.mxu0 0.0
    %2161 = vmatprep.mubr.f32.mxu0 0.0
    %v2162 = vand.u32 %v1792, 4294901760
    %2163 = vmatmul.mubr.f32.gmra.mrb[0].mxu0 %v2162
    %v2164 = vpop.f32.mrb[0].mxu0
    %v2165 = vadd.f32 %v2091, %v2164
    %v2166 = vpop.f32.mrb[0].mxu0
    %2167 = vdwg.mxu0
    %2168 = vmatprep.subr.mxu0 0.0
    %v2169 = vand.u32 %v1343, 4294901760
    %2170 = vmatpush1.msra.mxu0 %v2169
    %2171 = vmatprep.subr.mxu0 0.0
    %2172 = vmatpush1.msra.mxu0 0.0
    %2173 = vmatprep.subr.mxu0 0.0
    %2174 = vmatpush1.msra.mxu0 0.0
    %2175 = vmatprep.subr.mxu0 0.0
    %2176 = vmatpush1.msra.mxu0 0.0
    %2177 = vmatprep.subr.mxu0 0.0
    %2178 = vmatpush1.msra.mxu0 0.0
    %2179 = vmatprep.subr.mxu0 0.0
    %2180 = vmatpush1.msra.mxu0 0.0
    %2181 = vmatprep.subr.mxu0 0.0
    %2182 = vmatpush1.msra.mxu0 0.0
    %2183 = vmatprep.subr.mxu0 0.0
    %2184 = vmatpush1.msra.mxu0 0.0
    %2185 = vmatprep.subr.mxu0 0.0
    %2186 = vmatpush1.msra.mxu0 0.0
    %2187 = vmatprep.subr.mxu0 0.0
    %2188 = vmatpush1.msra.mxu0 0.0
    %2189 = vmatprep.subr.mxu0 0.0
    %2190 = vmatpush1.msra.mxu0 0.0
    %2191 = vmatprep.subr.mxu0 0.0
    %2192 = vmatpush1.msra.mxu0 0.0
    %2193 = vmatprep.subr.mxu0 0.0
    %2194 = vmatpush1.msra.mxu0 0.0
    %2195 = vmatprep.subr.mxu0 0.0
    %2196 = vmatpush1.msra.mxu0 0.0
    %2197 = vmatprep.subr.mxu0 0.0
    %2198 = vmatpush1.msra.mxu0 0.0
    %2199 = vmatprep.subr.mxu0 0.0
    %2200 = vmatpush1.msra.mxu0 0.0
    %2201 = vmatprep.subr.mxu0 0.0
    %2202 = vmatpush1.msra.mxu0 0.0
    %2203 = vmatprep.subr.mxu0 0.0
    %2204 = vmatpush1.msra.mxu0 0.0
    %2205 = vmatprep.subr.mxu0 0.0
    %2206 = vmatpush1.msra.mxu0 0.0
    %2207 = vmatprep.subr.mxu0 0.0
    %2208 = vmatpush1.msra.mxu0 0.0
    %2209 = vmatprep.subr.mxu0 0.0
    %2210 = vmatpush1.msra.mxu0 0.0
    %2211 = vmatprep.subr.mxu0 0.0
    %2212 = vmatpush1.msra.mxu0 0.0
    %2213 = vmatprep.subr.mxu0 0.0
    %2214 = vmatpush1.msra.mxu0 0.0
    %2215 = vmatprep.subr.mxu0 0.0
    %2216 = vmatpush1.msra.mxu0 0.0
    %2217 = vmatprep.subr.mxu0 0.0
    %2218 = vmatpush1.msra.mxu0 0.0
    %2219 = vmatprep.subr.mxu0 0.0
    %2220 = vmatpush1.msra.mxu0 0.0
    %2221 = vmatprep.subr.mxu0 0.0
    %2222 = vmatpush1.msra.mxu0 0.0
    %2223 = vmatprep.subr.mxu0 0.0
    %2224 = vmatpush1.msra.mxu0 0.0
    %2225 = vmatprep.subr.mxu0 0.0
    %2226 = vmatpush1.msra.mxu0 0.0
    %2227 = vmatprep.subr.mxu0 0.0
    %2228 = vmatpush1.msra.mxu0 0.0
    %2229 = vmatprep.subr.mxu0 0.0
    %2230 = vmatpush1.msra.mxu0 0.0
    %2231 = vmatprep.subr.mxu0 0.0
    %2232 = vmatpush1.msra.mxu0 0.0
    %2233 = vmatprep.mubr.f32.mxu0 0.0
    %v2234 = vand.u32 %v1792, 4294901760
    %2235 = vmatmul.mubr.f32.gmra.mrb[0].mxu0 %v2234
    %v2236 = vpop.f32.mrb[0].mxu0
    %v2237 = vadd.f32 %v2165, %v2236
    %v2238 = vpop.f32.mrb[0].mxu0
    %2239 = vdwg.mxu0
    %v2240 = vld [vmem:[%s1] sm:$0x1]
    %v2241 = vsub.f32 %v21, %v1788
    %v2242 = vmul.f32 %v2241, %v2237
    %v2244 = vlaneseq
    %v2245 = vshrl.u32 %v2244, 7
    %v2246 = vsub.s32 0, %v2245
    %v2247 = vrot.slane %v2240, %v2246
    %v2249 = vmul.f32 %v2247, %v2242
    %v2250 = vld [vmem:[%s2] sm:$0x1]
    %v2252 = vlaneseq
    %v2253 = vshrl.u32 %v2252, 7
    %v2254 = vsub.s32 0, %v2253
    %v2255 = vrot.slane %v2250, %v2254
    %v2257 = vadd.f32 %v2249, %v2255
    %2258 = vst [vmem:[#allocation2] sm:$0xf] %v2257
    // Predicated region
    $region22: #{tpu_custom_call.1} parent=1 // pred_check
      _
    $region23: #{tpu_custom_call.1} parent=1 // pred_check_branch
      %2260 = sbr.rel (0) target = $region25
    $region24: #{tpu_custom_call.1} parent=1 // pred_region
      %s2262 = ssub.s32 64, 64
      %2263 = vsyncadd [#allocation3], %s2262
      %s2265 = sshll.u32 [#allocation2], 4
      %s2266 = int_to_ptr.vmem [resolvable:$true] %s2265
      %2268 = dma.vmem_to_hbm [thread:$0]  %s2266, 64, %s5, [#allocation3]
    $region25: #{tpu_custom_call.1} parent=1 // pred_fallthru
      _
    // Predicated region
    $region26: #{tpu_custom_call.1} parent=1 // pred_check
      _
    $region27: #{tpu_custom_call.1} parent=1 // pred_check_branch
      %2270 = sbr.rel (0) target = $region29
    $region28: #{tpu_custom_call.1} parent=1 // pred_region
      %2271 = dma.done [#allocation3], 64
    $region29: #{tpu_custom_call.1} parent=1 // pred_fallthru
      _
    %2272 = vsyncpa [#allocation3], 1

</llo_original>
